<compile_context>
chip_gen: v7x
topology: tpu7x:2x2x1
jax: 0.10.0
libtpu: 0.0.40
codegen_flags: <defaults>
</compile_context>

<pallas_src>
import jax
import jax.numpy as jnp
from jax.experimental import pallas as pl
from jax.experimental.pallas import tpu as pltpu

# ---- model hyper-parameters (the "model_params" dict of the torch module) ----
EMBED_DIM = 32
HEAD_NUM = 2
QKV_DIM = 16
FF_HIDDEN = 64
N_LAYERS = 2                                   # decoder_layer_num
HEAD_TOTAL = HEAD_NUM * QKV_DIM                # 32
QKV_WIDTH = 2 * HEAD_TOTAL + HEAD_NUM * EMBED_DIM   # 128 lanes: [q | k | v'_h0 | v'_h1]


# ----------------------------------------------------------------------------
# Fused kernel: last-node embedding + N_LAYERS decoder layers + final head
# + masked softmax + small-prob bump + scatter into (B, problem_size).
# No grid: everything (weights ~60 KB + activations ~few KB) is VMEM-resident
# for the whole pass.
# ----------------------------------------------------------------------------
def _fused_decoder_kernel(x_ref, idx_ref, w_last_ref, b_last_ref,
                          wqkv_ref, bc_ref,
                          w1_ref, b1_ref, w2_ref, b2_ref,
                          wf_ref, bf_ref, o_ref):
    B, S, D = x_ref.shape
    M = B * S
    H = HEAD_TOTAL
    VOFF = 2 * H                                   # start of the folded-v columns
    P = o_ref.shape[1]

    x = x_ref[...]                                 # (B, S, D)

    # embedding_last_node: apply the (D,D) linear only to the last seq row of
    # each batch element, then merge it back with one select.
    x_last = x[:, S - 1, :]                                            # (B, D)
    y_last = (jnp.dot(x_last, w_last_ref[...],
                      preferred_element_type=jnp.float32)
              + b_last_ref[...])                                       # (B, D)
    sidx = jax.lax.broadcasted_iota(jnp.int32, (B, S, D), 1)
    out = jnp.where(sidx == S - 1, y_last[:, None, :], x)              # (B, S, D)
    out = out.reshape(M, D)                                            # flatten batch

    for l in range(N_LAYERS):                      # static unroll
        wqkv = wqkv_ref[l]                         # (D, 128) = [q | k | v'_h0 | v'_h1]
        bc = bc_ref[l]                             # (1, D)   multi_head_combine bias
        w1 = w1_ref[l]
        b1 = b1_ref[l]
        w2 = w2_ref[l]
        b2 = b2_ref[l]

        # fused q/k/v' projection; 1/sqrt(dk) folded into q columns, Wc folded
        # into the v' columns — one 128-lane-wide MXU push per layer.
        qkv = jnp.dot(out, wqkv, preferred_element_type=jnp.float32)   # (M, 128)
        qkv_b = qkv.reshape(B, S, QKV_WIDTH)

        mh = None
        for h in range(HEAD_NUM):                  # static unroll
            qh = qkv_b[:, :, h * QKV_DIM:(h + 1) * QKV_DIM]            # (B, S, dk)
            kh = qkv_b[:, :, H + h * QKV_DIM:H + (h + 1) * QKV_DIM]    # (B, S, dk)
            vch = qkv_b[:, :, VOFF + h * D:VOFF + (h + 1) * D]         # (B, S, D)
            s = jnp.einsum('bqd,bkd->bqk', qh, kh,
                           preferred_element_type=jnp.float32)         # (B, S, S)
            s = s - jnp.max(s, axis=-1, keepdims=True)
            e = jnp.exp(s)
            p = e * pl.reciprocal(jnp.sum(e, axis=-1, keepdims=True),
                                  approx=True)                         # softmax(dim=3)
            # Wc pre-folded into v': this einsum directly yields the head's
            # (B, S, D) contribution to multi_head_combine.
            contrib = jnp.einsum('bqk,bkd->bqd', p, vch,
                                 preferred_element_type=jnp.float32)
            mh = contrib if mh is None else mh + contrib

        out1 = out + mh.reshape(M, D) + bc                              # residual 1
        hdn = jnp.maximum(
            jnp.dot(out1, w1, preferred_element_type=jnp.float32) + b1, 0.0)
        ff = jnp.dot(hdn, w2, preferred_element_type=jnp.float32) + b2
        out = out1 + ff                                                 # residual 2

    # Final head: Linear_final (Dout=1) as VPU multiply + lane reduction.
    out3 = out.reshape(B, S, D)
    logits = jnp.sum(out3 * wf_ref[...], axis=-1) + bf_ref[...]         # (B, S)
    col = jax.lax.broadcasted_iota(jnp.int32, (B, S), 1)
    logits = jnp.where(col == S - 1, -jnp.inf, logits)                  # out[:, -1] += -inf
    m = jnp.max(logits, axis=-1, keepdims=True)
    e = jnp.exp(logits - m)
    probs = e / jnp.sum(e, axis=-1, keepdims=True)   # exact divide (torch parity)
    probs = jnp.where(probs <= 1e-5, probs + 1e-7, probs)               # small-prob bump

    # Fused masked-fill: scatter the first S-1 probs into the ascending-sorted
    # unselect positions, everything else is 1e-20 (matches torch boolean fill).
    idx = idx_ref[...]                                                  # (B, S-1) int32
    pcol = jax.lax.broadcasted_iota(jnp.int32, (B, P), 1)
    new_props = jnp.full((B, P), 1e-20, dtype=jnp.float32)
    for j in range(S - 1):                          # static unroll (7 selects)
        tgt = idx[:, j:j + 1]                                           # (B, 1)
        val = probs[:, j:j + 1]                                         # (B, 1)
        new_props = jnp.where(pcol == tgt, val, new_props)
    o_ref[...] = new_props


def pallas_fused_decoder(x, sorted_unselect, params, problem_size):
    B, S, D = x.shape
    vmem = lambda: pl.BlockSpec(memory_space=pltpu.MemorySpace.VMEM)

    return pl.pallas_call(
        _fused_decoder_kernel,
        out_shape=jax.ShapeDtypeStruct((B, problem_size), jnp.float32),
        in_specs=[vmem() for _ in range(12)],
        out_specs=vmem(),
    )(x, sorted_unselect,
      params["w_last"], params["b_last"],
      params["wqkv"], params["bc"],
      params["w1"], params["b1"], params["w2"], params["b2"],
      params["w_final"], params["b_final"])


# ----------------------------------------------------------------------------
# Full TSP_Decoder forward: a single fused kernel call (+ one tiny sort).
# ----------------------------------------------------------------------------
def tsp_decoder_forward(params, embedded_norm_last_knn_node, unselect_list,
                        problem_size):
    # torch fills the boolean-mask positions in ascending index order, so the
    # kernel scatters probs[:, j] to the j-th smallest unselect index.
    sorted_idx = jnp.sort(unselect_list, axis=1).astype(jnp.int32)
    new_props = pallas_fused_decoder(embedded_norm_last_knn_node, sorted_idx,
                                     params, problem_size)
    return new_props, unselect_list


# ----------------------------------------------------------------------------
# Deterministic parameter construction (mirrors the nn.Linear shapes).
# Wq/Wk/Wv(+Wc) merged per layer: wqkv = [Wq/sqrt(dk) | Wk | Wv_h0@Wc_h0 | Wv_h1@Wc_h1]
# ----------------------------------------------------------------------------
def make_params(key):
    def w(k, shape, scale=0.1):
        return jax.random.normal(k, shape, dtype=jnp.float32) * scale

    keys = iter(jax.random.split(key, 64))
    D, H = EMBED_DIM, HEAD_TOTAL
    inv_sqrt_dk = 1.0 / (QKV_DIM ** 0.5)

    params = {
        "w_last": w(next(keys), (D, D)),
        "b_last": w(next(keys), (1, D)),
        "w_final": w(next(keys), (1, D)),      # Linear_final weight as a row vector
        "b_final": w(next(keys), (1, 1)),
    }
    # NOTE: embedding_last_node_pos and k_1 exist in __init__ but are unused in forward().
    wqkv_l, bc_l, w1_l, b1_l, w2_l, b2_l = [], [], [], [], [], []
    for _ in range(N_LAYERS):
        wq = w(next(keys), (D, H))
        wk = w(next(keys), (D, H))
        wv = w(next(keys), (D, H))
        wc = w(next(keys), (H, D))             # multi_head_combine weight (in,out)
        v_folded = [wv[:, h * QKV_DIM:(h + 1) * QKV_DIM]
                    @ wc[h * QKV_DIM:(h + 1) * QKV_DIM, :]
                    for h in range(HEAD_NUM)]  # each (D, D)
        wqkv_l.append(jnp.concatenate([wq * inv_sqrt_dk, wk] + v_folded, axis=1))
        bc_l.append(w(next(keys), (1, D)))
        w1_l.append(w(next(keys), (D, FF_HIDDEN)))
        b1_l.append(w(next(keys), (1, FF_HIDDEN)))
        w2_l.append(w(next(keys), (FF_HIDDEN, D)))
        b2_l.append(w(next(keys), (1, D)))
    params.update({
        "wqkv": jnp.stack(wqkv_l), "bc": jnp.stack(bc_l),
        "w1": jnp.stack(w1_l), "b1": jnp.stack(b1_l),
        "w2": jnp.stack(w2_l), "b2": jnp.stack(b2_l),
    })
    return params


if __name__ == "__main__":
    key = jax.random.PRNGKey(0)
    k_params, k_x, k_u0, k_u1 = jax.random.split(key, 4)

    B, S = 2, 8                 # seq = 7 knn nodes + 1 last node
    problem_size = 16

    params = make_params(k_params)
    x = jax.random.normal(k_x, (B, S, EMBED_DIM), dtype=jnp.float32)

    # unselect_list: S-1 unique node indices per batch row (required so the
    # boolean-mask assignment in the torch reference is shape-consistent).
    u0 = jax.random.permutation(k_u0, problem_size)[: S - 1]
    u1 = jax.random.permutation(k_u1, problem_size)[: S - 1]
    unselect_list = jnp.stack([u0, u1]).astype(jnp.int32)

    forward = jax.jit(tsp_decoder_forward, static_argnames=("problem_size",))
    new_props, returned_unselect = forward(
        params, x, unselect_list, problem_size=problem_size)
    jax.block_until_ready(new_props)

    assert new_props.shape == (B, problem_size)
    assert bool(jnp.all(jnp.isfinite(new_props)))
    # positions not in unselect_list must hold exactly the 1e-20 filler
    sel_mask = jnp.zeros((B, problem_size), bool).at[
        jnp.arange(B)[:, None], unselect_list].set(True)
    assert bool(jnp.all(jnp.where(sel_mask, True, new_props == 1e-20)))
    print("KERNEL_OK")
</pallas_src>

<mosaic_0001>
module attributes {stable_mosaic.version = 11 : i64} {
  func.func @_fused_decoder_kernel(%arg0: memref<2x8x32xf32, #tpu.memory_space<vmem>>, %arg1: memref<2x7xi32, #tpu.memory_space<vmem>>, %arg2: memref<32x32xf32, #tpu.memory_space<vmem>>, %arg3: memref<1x32xf32, #tpu.memory_space<vmem>>, %arg4: memref<2x32x128xf32, #tpu.memory_space<vmem>>, %arg5: memref<2x1x32xf32, #tpu.memory_space<vmem>>, %arg6: memref<2x32x64xf32, #tpu.memory_space<vmem>>, %arg7: memref<2x1x64xf32, #tpu.memory_space<vmem>>, %arg8: memref<2x64x32xf32, #tpu.memory_space<vmem>>, %arg9: memref<2x1x32xf32, #tpu.memory_space<vmem>>, %arg10: memref<1x32xf32, #tpu.memory_space<vmem>>, %arg11: memref<1x1xf32, #tpu.memory_space<vmem>>, %arg12: memref<2x16xf32, #tpu.memory_space<vmem>>) attributes {dimension_semantics = [], scalar_prefetch = 0 : i64, scratch_operands = 0 : i64, tpu.core_type = #tpu.core_type<tc>} {
    %c0 = arith.constant 0 : index
    %c0_0 = arith.constant 0 : index
    %c0_1 = arith.constant 0 : index
    %0 = vector.load %arg0[%c0, %c0_0, %c0_1] : memref<2x8x32xf32, #tpu.memory_space<vmem>>, vector<2x8x32xf32>
    %1 = vector.extract_strided_slice %0 {offsets = [0, 7, 0], sizes = [2, 1, 32], strides = [1, 1, 1]} : vector<2x8x32xf32> to vector<2x1x32xf32>
    %2 = vector.shape_cast %1 : vector<2x1x32xf32> to vector<2x32xf32>
    %c0_2 = arith.constant 0 : index
    %c0_3 = arith.constant 0 : index
    %3 = vector.load %arg2[%c0_2, %c0_3] : memref<32x32xf32, #tpu.memory_space<vmem>>, vector<32x32xf32>
    %cst = arith.constant dense<0.000000e+00> : vector<2x32xf32>
    %4 = tpu.matmul %2, %3, %cst {dimension_numbers = #tpu.dot_dimension_numbers<[1], [0], [0], [1], [0, 0, 1, 1], [], []>} : vector<2x32xf32>, vector<32x32xf32>, vector<2x32xf32> -> vector<2x32xf32>
    %c0_4 = arith.constant 0 : index
    %c0_5 = arith.constant 0 : index
    %5 = vector.load %arg3[%c0_4, %c0_5] : memref<1x32xf32, #tpu.memory_space<vmem>>, vector<1x32xf32>
    %6 = vector.broadcast %5 : vector<1x32xf32> to vector<2x32xf32>
    %7 = arith.addf %4, %6 : vector<2x32xf32>
    %8 = tpu.iota {dimensions = array<i32: 1>} : vector<2x8x32xi32>
    %c7_i32 = arith.constant 7 : i32
    %9 = vector.broadcast %c7_i32 : i32 to vector<2x8x32xi32>
    %10 = arith.cmpi eq, %8, %9 : vector<2x8x32xi32>
    %11 = vector.shape_cast %7 : vector<2x32xf32> to vector<2x1x32xf32>
    %12 = vector.shape_cast %11 : vector<2x1x32xf32> to vector<2x1x32xf32>
    %13 = vector.broadcast %12 : vector<2x1x32xf32> to vector<2x8x32xf32>
    %14 = arith.select %10, %13, %0 : vector<2x8x32xi1>, vector<2x8x32xf32>
    %15 = vector.shape_cast %14 : vector<2x8x32xf32> to vector<16x32xf32>
    %c0_6 = arith.constant 0 : index
    %c0_7 = arith.constant 0 : index
    %c0_8 = arith.constant 0 : index
    %16 = vector.load %arg4[%c0_6, %c0_7, %c0_8] : memref<2x32x128xf32, #tpu.memory_space<vmem>>, vector<1x32x128xf32>
    %17 = vector.shape_cast %16 : vector<1x32x128xf32> to vector<32x128xf32>
    %c0_9 = arith.constant 0 : index
    %c0_10 = arith.constant 0 : index
    %c0_11 = arith.constant 0 : index
    %18 = vector.load %arg5[%c0_9, %c0_10, %c0_11] : memref<2x1x32xf32, #tpu.memory_space<vmem>>, vector<1x1x32xf32>
    %19 = vector.shape_cast %18 : vector<1x1x32xf32> to vector<1x32xf32>
    %c0_12 = arith.constant 0 : index
    %c0_13 = arith.constant 0 : index
    %c0_14 = arith.constant 0 : index
    %20 = vector.load %arg6[%c0_12, %c0_13, %c0_14] : memref<2x32x64xf32, #tpu.memory_space<vmem>>, vector<1x32x64xf32>
    %21 = vector.shape_cast %20 : vector<1x32x64xf32> to vector<32x64xf32>
    %c0_15 = arith.constant 0 : index
    %c0_16 = arith.constant 0 : index
    %c0_17 = arith.constant 0 : index
    %22 = vector.load %arg7[%c0_15, %c0_16, %c0_17] : memref<2x1x64xf32, #tpu.memory_space<vmem>>, vector<1x1x64xf32>
    %23 = vector.shape_cast %22 : vector<1x1x64xf32> to vector<1x64xf32>
    %c0_18 = arith.constant 0 : index
    %c0_19 = arith.constant 0 : index
    %c0_20 = arith.constant 0 : index
    %24 = vector.load %arg8[%c0_18, %c0_19, %c0_20] : memref<2x64x32xf32, #tpu.memory_space<vmem>>, vector<1x64x32xf32>
    %25 = vector.shape_cast %24 : vector<1x64x32xf32> to vector<64x32xf32>
    %c0_21 = arith.constant 0 : index
    %c0_22 = arith.constant 0 : index
    %c0_23 = arith.constant 0 : index
    %26 = vector.load %arg9[%c0_21, %c0_22, %c0_23] : memref<2x1x32xf32, #tpu.memory_space<vmem>>, vector<1x1x32xf32>
    %27 = vector.shape_cast %26 : vector<1x1x32xf32> to vector<1x32xf32>
    %cst_24 = arith.constant dense<0.000000e+00> : vector<16x128xf32>
    %28 = tpu.matmul %15, %17, %cst_24 {dimension_numbers = #tpu.dot_dimension_numbers<[1], [0], [0], [1], [0, 0, 1, 1], [], []>} : vector<16x32xf32>, vector<32x128xf32>, vector<16x128xf32> -> vector<16x128xf32>
    %29 = vector.shape_cast %28 : vector<16x128xf32> to vector<2x8x128xf32>
    %30 = vector.extract_strided_slice %29 {offsets = [0, 0, 0], sizes = [2, 8, 16], strides = [1, 1, 1]} : vector<2x8x128xf32> to vector<2x8x16xf32>
    %31 = vector.extract_strided_slice %29 {offsets = [0, 0, 32], sizes = [2, 8, 16], strides = [1, 1, 1]} : vector<2x8x128xf32> to vector<2x8x16xf32>
    %32 = vector.extract_strided_slice %29 {offsets = [0, 0, 64], sizes = [2, 8, 32], strides = [1, 1, 1]} : vector<2x8x128xf32> to vector<2x8x32xf32>
    "tpu.trace_start"() <{level = 10 : i32, message = "bqd,bkd->bqk"}> : () -> ()
    %cst_25 = arith.constant dense<0.000000e+00> : vector<2x8x8xf32>
    %33 = tpu.matmul %30, %31, %cst_25 {dimension_numbers = #tpu.dot_dimension_numbers<[2], [2], [1], [1], [0, 0, 0, 1, 1, 1], [0], [0]>} : vector<2x8x16xf32>, vector<2x8x16xf32>, vector<2x8x8xf32> -> vector<2x8x8xf32>
    "tpu.trace_stop"() : () -> ()
    %cst_26 = arith.constant dense<0xFF800000> : vector<2x8xf32>
    %34 = vector.multi_reduction <maximumf>, %33, %cst_26 [2] : vector<2x8x8xf32> to vector<2x8xf32>
    %35 = vector.shape_cast %34 : vector<2x8xf32> to vector<2x8x1xf32>
    %36 = vector.broadcast %35 : vector<2x8x1xf32> to vector<2x8x8xf32>
    %37 = arith.subf %33, %36 : vector<2x8x8xf32>
    %38 = math.exp %37 : vector<2x8x8xf32>
    %cst_27 = arith.constant dense<0.000000e+00> : vector<2x8xf32>
    %39 = vector.multi_reduction <add>, %38, %cst_27 [2] : vector<2x8x8xf32> to vector<2x8xf32>
    %40 = vector.shape_cast %39 : vector<2x8xf32> to vector<2x8x1xf32>
    %41 = tpu.reciprocal %40 {approx = true} : vector<2x8x1xf32> -> vector<2x8x1xf32>
    %42 = vector.broadcast %41 : vector<2x8x1xf32> to vector<2x8x8xf32>
    %43 = arith.mulf %38, %42 : vector<2x8x8xf32>
    "tpu.trace_start"() <{level = 10 : i32, message = "bqk,bkd->bqd"}> : () -> ()
    %cst_28 = arith.constant dense<0.000000e+00> : vector<2x8x32xf32>
    %44 = tpu.matmul %43, %32, %cst_28 {dimension_numbers = #tpu.dot_dimension_numbers<[2], [1], [1], [2], [0, 0, 0, 1, 1, 2], [0], [0]>} : vector<2x8x8xf32>, vector<2x8x32xf32>, vector<2x8x32xf32> -> vector<2x8x32xf32>
    "tpu.trace_stop"() : () -> ()
    %45 = vector.extract_strided_slice %29 {offsets = [0, 0, 16], sizes = [2, 8, 16], strides = [1, 1, 1]} : vector<2x8x128xf32> to vector<2x8x16xf32>
    %46 = vector.extract_strided_slice %29 {offsets = [0, 0, 48], sizes = [2, 8, 16], strides = [1, 1, 1]} : vector<2x8x128xf32> to vector<2x8x16xf32>
    %47 = vector.extract_strided_slice %29 {offsets = [0, 0, 96], sizes = [2, 8, 32], strides = [1, 1, 1]} : vector<2x8x128xf32> to vector<2x8x32xf32>
    "tpu.trace_start"() <{level = 10 : i32, message = "bqd,bkd->bqk"}> : () -> ()
    %cst_29 = arith.constant dense<0.000000e+00> : vector<2x8x8xf32>
    %48 = tpu.matmul %45, %46, %cst_29 {dimension_numbers = #tpu.dot_dimension_numbers<[2], [2], [1], [1], [0, 0, 0, 1, 1, 1], [0], [0]>} : vector<2x8x16xf32>, vector<2x8x16xf32>, vector<2x8x8xf32> -> vector<2x8x8xf32>
    "tpu.trace_stop"() : () -> ()
    %cst_30 = arith.constant dense<0xFF800000> : vector<2x8xf32>
    %49 = vector.multi_reduction <maximumf>, %48, %cst_30 [2] : vector<2x8x8xf32> to vector<2x8xf32>
    %50 = vector.shape_cast %49 : vector<2x8xf32> to vector<2x8x1xf32>
    %51 = vector.broadcast %50 : vector<2x8x1xf32> to vector<2x8x8xf32>
    %52 = arith.subf %48, %51 : vector<2x8x8xf32>
    %53 = math.exp %52 : vector<2x8x8xf32>
    %cst_31 = arith.constant dense<0.000000e+00> : vector<2x8xf32>
    %54 = vector.multi_reduction <add>, %53, %cst_31 [2] : vector<2x8x8xf32> to vector<2x8xf32>
    %55 = vector.shape_cast %54 : vector<2x8xf32> to vector<2x8x1xf32>
    %56 = tpu.reciprocal %55 {approx = true} : vector<2x8x1xf32> -> vector<2x8x1xf32>
    %57 = vector.broadcast %56 : vector<2x8x1xf32> to vector<2x8x8xf32>
    %58 = arith.mulf %53, %57 : vector<2x8x8xf32>
    "tpu.trace_start"() <{level = 10 : i32, message = "bqk,bkd->bqd"}> : () -> ()
    %cst_32 = arith.constant dense<0.000000e+00> : vector<2x8x32xf32>
    %59 = tpu.matmul %58, %47, %cst_32 {dimension_numbers = #tpu.dot_dimension_numbers<[2], [1], [1], [2], [0, 0, 0, 1, 1, 2], [0], [0]>} : vector<2x8x8xf32>, vector<2x8x32xf32>, vector<2x8x32xf32> -> vector<2x8x32xf32>
    "tpu.trace_stop"() : () -> ()
    %60 = arith.addf %44, %59 : vector<2x8x32xf32>
    %61 = vector.shape_cast %60 : vector<2x8x32xf32> to vector<16x32xf32>
    %62 = arith.addf %15, %61 : vector<16x32xf32>
    %63 = vector.broadcast %19 : vector<1x32xf32> to vector<16x32xf32>
    %64 = arith.addf %62, %63 : vector<16x32xf32>
    %cst_33 = arith.constant dense<0.000000e+00> : vector<16x64xf32>
    %65 = tpu.matmul %64, %21, %cst_33 {dimension_numbers = #tpu.dot_dimension_numbers<[1], [0], [0], [1], [0, 0, 1, 1], [], []>} : vector<16x32xf32>, vector<32x64xf32>, vector<16x64xf32> -> vector<16x64xf32>
    %66 = vector.broadcast %23 : vector<1x64xf32> to vector<16x64xf32>
    %67 = arith.addf %65, %66 : vector<16x64xf32>
    %cst_34 = arith.constant 0.000000e+00 : f32
    %68 = vector.broadcast %cst_34 : f32 to vector<16x64xf32>
    %69 = arith.maximumf %67, %68 : vector<16x64xf32>
    %cst_35 = arith.constant dense<0.000000e+00> : vector<16x32xf32>
    %70 = tpu.matmul %69, %25, %cst_35 {dimension_numbers = #tpu.dot_dimension_numbers<[1], [0], [0], [1], [0, 0, 1, 1], [], []>} : vector<16x64xf32>, vector<64x32xf32>, vector<16x32xf32> -> vector<16x32xf32>
    %71 = vector.broadcast %27 : vector<1x32xf32> to vector<16x32xf32>
    %72 = arith.addf %70, %71 : vector<16x32xf32>
    %73 = arith.addf %64, %72 : vector<16x32xf32>
    %c1 = arith.constant 1 : index
    %c0_36 = arith.constant 0 : index
    %c0_37 = arith.constant 0 : index
    %74 = vector.load %arg4[%c1, %c0_36, %c0_37] : memref<2x32x128xf32, #tpu.memory_space<vmem>>, vector<1x32x128xf32>
    %75 = vector.shape_cast %74 : vector<1x32x128xf32> to vector<32x128xf32>
    %c1_38 = arith.constant 1 : index
    %c0_39 = arith.constant 0 : index
    %c0_40 = arith.constant 0 : index
    %76 = vector.load %arg5[%c1_38, %c0_39, %c0_40] : memref<2x1x32xf32, #tpu.memory_space<vmem>>, vector<1x1x32xf32>
    %77 = vector.shape_cast %76 : vector<1x1x32xf32> to vector<1x32xf32>
    %c1_41 = arith.constant 1 : index
    %c0_42 = arith.constant 0 : index
    %c0_43 = arith.constant 0 : index
    %78 = vector.load %arg6[%c1_41, %c0_42, %c0_43] : memref<2x32x64xf32, #tpu.memory_space<vmem>>, vector<1x32x64xf32>
    %79 = vector.shape_cast %78 : vector<1x32x64xf32> to vector<32x64xf32>
    %c1_44 = arith.constant 1 : index
    %c0_45 = arith.constant 0 : index
    %c0_46 = arith.constant 0 : index
    %80 = vector.load %arg7[%c1_44, %c0_45, %c0_46] : memref<2x1x64xf32, #tpu.memory_space<vmem>>, vector<1x1x64xf32>
    %81 = vector.shape_cast %80 : vector<1x1x64xf32> to vector<1x64xf32>
    %c1_47 = arith.constant 1 : index
    %c0_48 = arith.constant 0 : index
    %c0_49 = arith.constant 0 : index
    %82 = vector.load %arg8[%c1_47, %c0_48, %c0_49] : memref<2x64x32xf32, #tpu.memory_space<vmem>>, vector<1x64x32xf32>
    %83 = vector.shape_cast %82 : vector<1x64x32xf32> to vector<64x32xf32>
    %c1_50 = arith.constant 1 : index
    %c0_51 = arith.constant 0 : index
    %c0_52 = arith.constant 0 : index
    %84 = vector.load %arg9[%c1_50, %c0_51, %c0_52] : memref<2x1x32xf32, #tpu.memory_space<vmem>>, vector<1x1x32xf32>
    %85 = vector.shape_cast %84 : vector<1x1x32xf32> to vector<1x32xf32>
    %cst_53 = arith.constant dense<0.000000e+00> : vector<16x128xf32>
    %86 = tpu.matmul %73, %75, %cst_53 {dimension_numbers = #tpu.dot_dimension_numbers<[1], [0], [0], [1], [0, 0, 1, 1], [], []>} : vector<16x32xf32>, vector<32x128xf32>, vector<16x128xf32> -> vector<16x128xf32>
    %87 = vector.shape_cast %86 : vector<16x128xf32> to vector<2x8x128xf32>
    %88 = vector.extract_strided_slice %87 {offsets = [0, 0, 0], sizes = [2, 8, 16], strides = [1, 1, 1]} : vector<2x8x128xf32> to vector<2x8x16xf32>
    %89 = vector.extract_strided_slice %87 {offsets = [0, 0, 32], sizes = [2, 8, 16], strides = [1, 1, 1]} : vector<2x8x128xf32> to vector<2x8x16xf32>
    %90 = vector.extract_strided_slice %87 {offsets = [0, 0, 64], sizes = [2, 8, 32], strides = [1, 1, 1]} : vector<2x8x128xf32> to vector<2x8x32xf32>
    "tpu.trace_start"() <{level = 10 : i32, message = "bqd,bkd->bqk"}> : () -> ()
    %cst_54 = arith.constant dense<0.000000e+00> : vector<2x8x8xf32>
    %91 = tpu.matmul %88, %89, %cst_54 {dimension_numbers = #tpu.dot_dimension_numbers<[2], [2], [1], [1], [0, 0, 0, 1, 1, 1], [0], [0]>} : vector<2x8x16xf32>, vector<2x8x16xf32>, vector<2x8x8xf32> -> vector<2x8x8xf32>
    "tpu.trace_stop"() : () -> ()
    %cst_55 = arith.constant dense<0xFF800000> : vector<2x8xf32>
    %92 = vector.multi_reduction <maximumf>, %91, %cst_55 [2] : vector<2x8x8xf32> to vector<2x8xf32>
    %93 = vector.shape_cast %92 : vector<2x8xf32> to vector<2x8x1xf32>
    %94 = vector.broadcast %93 : vector<2x8x1xf32> to vector<2x8x8xf32>
    %95 = arith.subf %91, %94 : vector<2x8x8xf32>
    %96 = math.exp %95 : vector<2x8x8xf32>
    %cst_56 = arith.constant dense<0.000000e+00> : vector<2x8xf32>
    %97 = vector.multi_reduction <add>, %96, %cst_56 [2] : vector<2x8x8xf32> to vector<2x8xf32>
    %98 = vector.shape_cast %97 : vector<2x8xf32> to vector<2x8x1xf32>
    %99 = tpu.reciprocal %98 {approx = true} : vector<2x8x1xf32> -> vector<2x8x1xf32>
    %100 = vector.broadcast %99 : vector<2x8x1xf32> to vector<2x8x8xf32>
    %101 = arith.mulf %96, %100 : vector<2x8x8xf32>
    "tpu.trace_start"() <{level = 10 : i32, message = "bqk,bkd->bqd"}> : () -> ()
    %cst_57 = arith.constant dense<0.000000e+00> : vector<2x8x32xf32>
    %102 = tpu.matmul %101, %90, %cst_57 {dimension_numbers = #tpu.dot_dimension_numbers<[2], [1], [1], [2], [0, 0, 0, 1, 1, 2], [0], [0]>} : vector<2x8x8xf32>, vector<2x8x32xf32>, vector<2x8x32xf32> -> vector<2x8x32xf32>
    "tpu.trace_stop"() : () -> ()
    %103 = vector.extract_strided_slice %87 {offsets = [0, 0, 16], sizes = [2, 8, 16], strides = [1, 1, 1]} : vector<2x8x128xf32> to vector<2x8x16xf32>
    %104 = vector.extract_strided_slice %87 {offsets = [0, 0, 48], sizes = [2, 8, 16], strides = [1, 1, 1]} : vector<2x8x128xf32> to vector<2x8x16xf32>
    %105 = vector.extract_strided_slice %87 {offsets = [0, 0, 96], sizes = [2, 8, 32], strides = [1, 1, 1]} : vector<2x8x128xf32> to vector<2x8x32xf32>
    "tpu.trace_start"() <{level = 10 : i32, message = "bqd,bkd->bqk"}> : () -> ()
    %cst_58 = arith.constant dense<0.000000e+00> : vector<2x8x8xf32>
    %106 = tpu.matmul %103, %104, %cst_58 {dimension_numbers = #tpu.dot_dimension_numbers<[2], [2], [1], [1], [0, 0, 0, 1, 1, 1], [0], [0]>} : vector<2x8x16xf32>, vector<2x8x16xf32>, vector<2x8x8xf32> -> vector<2x8x8xf32>
    "tpu.trace_stop"() : () -> ()
    %cst_59 = arith.constant dense<0xFF800000> : vector<2x8xf32>
    %107 = vector.multi_reduction <maximumf>, %106, %cst_59 [2] : vector<2x8x8xf32> to vector<2x8xf32>
    %108 = vector.shape_cast %107 : vector<2x8xf32> to vector<2x8x1xf32>
    %109 = vector.broadcast %108 : vector<2x8x1xf32> to vector<2x8x8xf32>
    %110 = arith.subf %106, %109 : vector<2x8x8xf32>
    %111 = math.exp %110 : vector<2x8x8xf32>
    %cst_60 = arith.constant dense<0.000000e+00> : vector<2x8xf32>
    %112 = vector.multi_reduction <add>, %111, %cst_60 [2] : vector<2x8x8xf32> to vector<2x8xf32>
    %113 = vector.shape_cast %112 : vector<2x8xf32> to vector<2x8x1xf32>
    %114 = tpu.reciprocal %113 {approx = true} : vector<2x8x1xf32> -> vector<2x8x1xf32>
    %115 = vector.broadcast %114 : vector<2x8x1xf32> to vector<2x8x8xf32>
    %116 = arith.mulf %111, %115 : vector<2x8x8xf32>
    "tpu.trace_start"() <{level = 10 : i32, message = "bqk,bkd->bqd"}> : () -> ()
    %cst_61 = arith.constant dense<0.000000e+00> : vector<2x8x32xf32>
    %117 = tpu.matmul %116, %105, %cst_61 {dimension_numbers = #tpu.dot_dimension_numbers<[2], [1], [1], [2], [0, 0, 0, 1, 1, 2], [0], [0]>} : vector<2x8x8xf32>, vector<2x8x32xf32>, vector<2x8x32xf32> -> vector<2x8x32xf32>
    "tpu.trace_stop"() : () -> ()
    %118 = arith.addf %102, %117 : vector<2x8x32xf32>
    %119 = vector.shape_cast %118 : vector<2x8x32xf32> to vector<16x32xf32>
    %120 = arith.addf %73, %119 : vector<16x32xf32>
    %121 = vector.broadcast %77 : vector<1x32xf32> to vector<16x32xf32>
    %122 = arith.addf %120, %121 : vector<16x32xf32>
    %cst_62 = arith.constant dense<0.000000e+00> : vector<16x64xf32>
    %123 = tpu.matmul %122, %79, %cst_62 {dimension_numbers = #tpu.dot_dimension_numbers<[1], [0], [0], [1], [0, 0, 1, 1], [], []>} : vector<16x32xf32>, vector<32x64xf32>, vector<16x64xf32> -> vector<16x64xf32>
    %124 = vector.broadcast %81 : vector<1x64xf32> to vector<16x64xf32>
    %125 = arith.addf %123, %124 : vector<16x64xf32>
    %cst_63 = arith.constant 0.000000e+00 : f32
    %126 = vector.broadcast %cst_63 : f32 to vector<16x64xf32>
    %127 = arith.maximumf %125, %126 : vector<16x64xf32>
    %cst_64 = arith.constant dense<0.000000e+00> : vector<16x32xf32>
    %128 = tpu.matmul %127, %83, %cst_64 {dimension_numbers = #tpu.dot_dimension_numbers<[1], [0], [0], [1], [0, 0, 1, 1], [], []>} : vector<16x64xf32>, vector<64x32xf32>, vector<16x32xf32> -> vector<16x32xf32>
    %129 = vector.broadcast %85 : vector<1x32xf32> to vector<16x32xf32>
    %130 = arith.addf %128, %129 : vector<16x32xf32>
    %131 = arith.addf %122, %130 : vector<16x32xf32>
    %132 = vector.shape_cast %131 : vector<16x32xf32> to vector<2x8x32xf32>
    %c0_65 = arith.constant 0 : index
    %c0_66 = arith.constant 0 : index
    %133 = vector.load %arg10[%c0_65, %c0_66] : memref<1x32xf32, #tpu.memory_space<vmem>>, vector<1x32xf32>
    %134 = vector.shape_cast %133 : vector<1x32xf32> to vector<1x1x32xf32>
    %135 = vector.broadcast %134 : vector<1x1x32xf32> to vector<2x8x32xf32>
    %136 = arith.mulf %132, %135 : vector<2x8x32xf32>
    %cst_67 = arith.constant dense<0.000000e+00> : vector<2x8xf32>
    %137 = vector.multi_reduction <add>, %136, %cst_67 [2] : vector<2x8x32xf32> to vector<2x8xf32>
    %c0_68 = arith.constant 0 : index
    %c0_69 = arith.constant 0 : index
    %138 = vector.load %arg11[%c0_68, %c0_69] : memref<1x1xf32, #tpu.memory_space<vmem>>, vector<1x1xf32>
    %139 = vector.broadcast %138 : vector<1x1xf32> to vector<2x8xf32>
    %140 = arith.addf %137, %139 : vector<2x8xf32>
    %141 = tpu.iota {dimensions = array<i32: 1>} : vector<2x8xi32>
    %c7_i32_70 = arith.constant 7 : i32
    %142 = vector.broadcast %c7_i32_70 : i32 to vector<2x8xi32>
    %143 = arith.cmpi eq, %141, %142 : vector<2x8xi32>
    %cst_71 = arith.constant 0xFF800000 : f32
    %144 = vector.broadcast %cst_71 : f32 to vector<2x8xf32>
    %145 = arith.select %143, %144, %140 : vector<2x8xi1>, vector<2x8xf32>
    %cst_72 = arith.constant dense<0xFF800000> : vector<2xf32>
    %146 = vector.multi_reduction <maximumf>, %145, %cst_72 [1] : vector<2x8xf32> to vector<2xf32>
    %147 = vector.shape_cast %146 : vector<2xf32> to vector<2x1xf32>
    %148 = vector.broadcast %147 : vector<2x1xf32> to vector<2x8xf32>
    %149 = arith.subf %145, %148 : vector<2x8xf32>
    %150 = math.exp %149 : vector<2x8xf32>
    %cst_73 = arith.constant dense<0.000000e+00> : vector<2xf32>
    %151 = vector.multi_reduction <add>, %150, %cst_73 [1] : vector<2x8xf32> to vector<2xf32>
    %152 = vector.shape_cast %151 : vector<2xf32> to vector<2x1xf32>
    %153 = vector.broadcast %152 : vector<2x1xf32> to vector<2x8xf32>
    %154 = arith.divf %150, %153 : vector<2x8xf32>
    %cst_74 = arith.constant 9.99999974E-6 : f32
    %155 = vector.broadcast %cst_74 : f32 to vector<2x8xf32>
    %156 = arith.cmpf ole, %154, %155 : vector<2x8xf32>
    %cst_75 = arith.constant 1.000000e-07 : f32
    %157 = vector.broadcast %cst_75 : f32 to vector<2x8xf32>
    %158 = arith.addf %154, %157 : vector<2x8xf32>
    %159 = arith.select %156, %158, %154 : vector<2x8xi1>, vector<2x8xf32>
    %c0_76 = arith.constant 0 : index
    %c0_77 = arith.constant 0 : index
    %160 = vector.load %arg1[%c0_76, %c0_77] : memref<2x7xi32, #tpu.memory_space<vmem>>, vector<2x7xi32>
    %161 = tpu.iota {dimensions = array<i32: 1>} : vector<2x16xi32>
    %cst_78 = arith.constant 9.99999968E-21 : f32
    %162 = vector.broadcast %cst_78 : f32 to vector<2x16xf32>
    %163 = vector.extract_strided_slice %160 {offsets = [0, 0], sizes = [2, 1], strides = [1, 1]} : vector<2x7xi32> to vector<2x1xi32>
    %164 = vector.extract_strided_slice %159 {offsets = [0, 0], sizes = [2, 1], strides = [1, 1]} : vector<2x8xf32> to vector<2x1xf32>
    %165 = vector.broadcast %163 : vector<2x1xi32> to vector<2x16xi32>
    %166 = arith.cmpi eq, %161, %165 : vector<2x16xi32>
    %167 = vector.shape_cast %164 : vector<2x1xf32> to vector<2x1xf32>
    %168 = vector.broadcast %167 : vector<2x1xf32> to vector<2x16xf32>
    %169 = arith.select %166, %168, %162 : vector<2x16xi1>, vector<2x16xf32>
    %170 = vector.extract_strided_slice %160 {offsets = [0, 1], sizes = [2, 1], strides = [1, 1]} : vector<2x7xi32> to vector<2x1xi32>
    %171 = vector.extract_strided_slice %159 {offsets = [0, 1], sizes = [2, 1], strides = [1, 1]} : vector<2x8xf32> to vector<2x1xf32>
    %172 = vector.broadcast %170 : vector<2x1xi32> to vector<2x16xi32>
    %173 = arith.cmpi eq, %161, %172 : vector<2x16xi32>
    %174 = vector.shape_cast %171 : vector<2x1xf32> to vector<2x1xf32>
    %175 = vector.broadcast %174 : vector<2x1xf32> to vector<2x16xf32>
    %176 = arith.select %173, %175, %169 : vector<2x16xi1>, vector<2x16xf32>
    %177 = vector.extract_strided_slice %160 {offsets = [0, 2], sizes = [2, 1], strides = [1, 1]} : vector<2x7xi32> to vector<2x1xi32>
    %178 = vector.extract_strided_slice %159 {offsets = [0, 2], sizes = [2, 1], strides = [1, 1]} : vector<2x8xf32> to vector<2x1xf32>
    %179 = vector.broadcast %177 : vector<2x1xi32> to vector<2x16xi32>
    %180 = arith.cmpi eq, %161, %179 : vector<2x16xi32>
    %181 = vector.shape_cast %178 : vector<2x1xf32> to vector<2x1xf32>
    %182 = vector.broadcast %181 : vector<2x1xf32> to vector<2x16xf32>
    %183 = arith.select %180, %182, %176 : vector<2x16xi1>, vector<2x16xf32>
    %184 = vector.extract_strided_slice %160 {offsets = [0, 3], sizes = [2, 1], strides = [1, 1]} : vector<2x7xi32> to vector<2x1xi32>
    %185 = vector.extract_strided_slice %159 {offsets = [0, 3], sizes = [2, 1], strides = [1, 1]} : vector<2x8xf32> to vector<2x1xf32>
    %186 = vector.broadcast %184 : vector<2x1xi32> to vector<2x16xi32>
    %187 = arith.cmpi eq, %161, %186 : vector<2x16xi32>
    %188 = vector.shape_cast %185 : vector<2x1xf32> to vector<2x1xf32>
    %189 = vector.broadcast %188 : vector<2x1xf32> to vector<2x16xf32>
    %190 = arith.select %187, %189, %183 : vector<2x16xi1>, vector<2x16xf32>
    %191 = vector.extract_strided_slice %160 {offsets = [0, 4], sizes = [2, 1], strides = [1, 1]} : vector<2x7xi32> to vector<2x1xi32>
    %192 = vector.extract_strided_slice %159 {offsets = [0, 4], sizes = [2, 1], strides = [1, 1]} : vector<2x8xf32> to vector<2x1xf32>
    %193 = vector.broadcast %191 : vector<2x1xi32> to vector<2x16xi32>
    %194 = arith.cmpi eq, %161, %193 : vector<2x16xi32>
    %195 = vector.shape_cast %192 : vector<2x1xf32> to vector<2x1xf32>
    %196 = vector.broadcast %195 : vector<2x1xf32> to vector<2x16xf32>
    %197 = arith.select %194, %196, %190 : vector<2x16xi1>, vector<2x16xf32>
    %198 = vector.extract_strided_slice %160 {offsets = [0, 5], sizes = [2, 1], strides = [1, 1]} : vector<2x7xi32> to vector<2x1xi32>
    %199 = vector.extract_strided_slice %159 {offsets = [0, 5], sizes = [2, 1], strides = [1, 1]} : vector<2x8xf32> to vector<2x1xf32>
    %200 = vector.broadcast %198 : vector<2x1xi32> to vector<2x16xi32>
    %201 = arith.cmpi eq, %161, %200 : vector<2x16xi32>
    %202 = vector.shape_cast %199 : vector<2x1xf32> to vector<2x1xf32>
    %203 = vector.broadcast %202 : vector<2x1xf32> to vector<2x16xf32>
    %204 = arith.select %201, %203, %197 : vector<2x16xi1>, vector<2x16xf32>
    %205 = vector.extract_strided_slice %160 {offsets = [0, 6], sizes = [2, 1], strides = [1, 1]} : vector<2x7xi32> to vector<2x1xi32>
    %206 = vector.extract_strided_slice %159 {offsets = [0, 6], sizes = [2, 1], strides = [1, 1]} : vector<2x8xf32> to vector<2x1xf32>
    %207 = vector.broadcast %205 : vector<2x1xi32> to vector<2x16xi32>
    %208 = arith.cmpi eq, %161, %207 : vector<2x16xi32>
    %209 = vector.shape_cast %206 : vector<2x1xf32> to vector<2x1xf32>
    %210 = vector.broadcast %209 : vector<2x1xf32> to vector<2x16xf32>
    %211 = arith.select %208, %210, %204 : vector<2x16xi1>, vector<2x16xf32>
    %c0_79 = arith.constant 0 : index
    %c0_80 = arith.constant 0 : index
    %212 = vector.load %arg12[%c0_79, %c0_80] : memref<2x16xf32, #tpu.memory_space<vmem>>, vector<2x16xf32>
    tpu.vector_store %arg12[%c0_79, %c0_80], %211 {strides = array<i32>} : memref<2x16xf32, #tpu.memory_space<vmem>>, vector<2x16xf32>,
    return
  }
}

</mosaic_0001>

<llo_original>
// kernel: tsp_decoder_forward.1
$region0: #{tsp_decoder_forward.1}
  #allocation0 [shape = 'u32[]', space=smem, size = 0x4, offset = 0x4, fixed_abs, tag = 'smem constant byte address 0x4 - core index']
  #allocation1 [shape = 'u32[144,128]{1,0:T(1,128)}', space=vmem, size = 0x12000, scoped, tag = 'internal scratch']
  #allocation2 [shape = 'f32[1,1]{1,0:T(1,128)S(1)}', space=vmem, size = 0x200, scoped, tag = 'scoped memory for tsp_decoder_forward.1']
  %s0 = inlined_call_operand.vmem [shape: f32[2,8,32], index: 0, kind: input, shape index: {}]
  %s1 = inlined_call_operand.vmem [shape: s32[2,7], index: 1, kind: input, shape index: {}]
  %s2 = inlined_call_operand.vmem [shape: f32[32,32], index: 2, kind: input, shape index: {}]
  %s3 = inlined_call_operand.vmem [shape: f32[1,32], index: 3, kind: input, shape index: {}]
  %s4 = inlined_call_operand.vmem [shape: f32[2,32,128], index: 4, kind: input, shape index: {}]
  %s5 = inlined_call_operand.vmem [shape: f32[2,1,32], index: 5, kind: input, shape index: {}]
  %s6 = inlined_call_operand.vmem [shape: f32[2,32,64], index: 6, kind: input, shape index: {}]
  %s7 = inlined_call_operand.vmem [shape: f32[2,1,64], index: 7, kind: input, shape index: {}]
  %s8 = inlined_call_operand.vmem [shape: f32[2,64,32], index: 8, kind: input, shape index: {}]
  %s9 = inlined_call_operand.vmem [shape: f32[2,1,32], index: 9, kind: input, shape index: {}]
  %s10 = inlined_call_operand.vmem [shape: f32[1,32], index: 10, kind: input, shape index: {}]
  %s11 = inlined_call_operand.<no memory space> [shape: f32[1,1], index: 11, kind: input, shape index: {}]
  %s12 = inlined_call_operand.hbm [shape: f32[2,16], index: 12, kind: output, shape index: {}]
  %s13 = sld [smem:[#allocation0]]
  $region58: #{tsp_decoder_forward.1} parent=0
    _
  %s15 = ssub.s32 1, %s13
  %s16 = scalar_select 0, %s15, %s13
  %v17 = vstv %s11
  %18 = vst [vmem:[#allocation2] sm:$0x1] %v17
  $region1: #{tsp_decoder_forward.1} parent=0
    #allocation3 [shape = 'u8[1024]{0}', space=vmem, size = 0x400, scoped, tag = 'output window, operand 0, single buffered']
    #allocation4 [shape = 's32[1]{0}', space=sflag, size = 0x4, scoped, tag = 'scoped memory for tsp_decoder_forward.1']
    %19 = vsyncpa [#allocation4], 0
    // Predicated region
    $region2: #{tsp_decoder_forward.1} parent=1 // pred_check
      _
    $region3: #{tsp_decoder_forward.1} parent=1 // pred_check_branch
      %21 = sbr.rel (0) target = $region5
    $region4: #{tsp_decoder_forward.1} parent=1 // pred_region
      _
    $region5: #{tsp_decoder_forward.1} parent=1 // pred_fallthru
      _
    // Predicated region
    $region6: #{tsp_decoder_forward.1} parent=1 // pred_check
      _
    $region7: #{tsp_decoder_forward.1} parent=1 // pred_check_branch
      %23 = sbr.rel (0) target = $region9
    $region8: #{tsp_decoder_forward.1} parent=1 // pred_region
      _
    $region9: #{tsp_decoder_forward.1} parent=1 // pred_fallthru
      _
    // Predicated region
    $region10: #{tsp_decoder_forward.1} parent=1 // pred_check
      _
    $region11: #{tsp_decoder_forward.1} parent=1 // pred_check_branch
      %25 = sbr.rel (0) target = $region13
    $region12: #{tsp_decoder_forward.1} parent=1 // pred_region
      _
    $region13: #{tsp_decoder_forward.1} parent=1 // pred_fallthru
      _
    // Predicated region
    $region14: #{tsp_decoder_forward.1} parent=1 // pred_check
      _
    $region15: #{tsp_decoder_forward.1} parent=1 // pred_check_branch
      %27 = sbr.rel (0) target = $region17
    $region16: #{tsp_decoder_forward.1} parent=1 // pred_region
      _
    $region17: #{tsp_decoder_forward.1} parent=1 // pred_fallthru
      _
    // Predicated region
    $region18: #{tsp_decoder_forward.1} parent=1 // pred_check
      _
    $region19: #{tsp_decoder_forward.1} parent=1 // pred_check_branch
      %29 = sbr.rel (0) target = $region21
    $region20: #{tsp_decoder_forward.1} parent=1 // pred_region
      _
    $region21: #{tsp_decoder_forward.1} parent=1 // pred_fallthru
      _
    // Predicated region
    $region22: #{tsp_decoder_forward.1} parent=1 // pred_check
      _
    $region23: #{tsp_decoder_forward.1} parent=1 // pred_check_branch
      %31 = sbr.rel (0) target = $region25
    $region24: #{tsp_decoder_forward.1} parent=1 // pred_region
      _
    $region25: #{tsp_decoder_forward.1} parent=1 // pred_fallthru
      _
    // Predicated region
    $region26: #{tsp_decoder_forward.1} parent=1 // pred_check
      _
    $region27: #{tsp_decoder_forward.1} parent=1 // pred_check_branch
      %33 = sbr.rel (0) target = $region29
    $region28: #{tsp_decoder_forward.1} parent=1 // pred_region
      _
    $region29: #{tsp_decoder_forward.1} parent=1 // pred_fallthru
      _
    // Predicated region
    $region30: #{tsp_decoder_forward.1} parent=1 // pred_check
      _
    $region31: #{tsp_decoder_forward.1} parent=1 // pred_check_branch
      %35 = sbr.rel (0) target = $region33
    $region32: #{tsp_decoder_forward.1} parent=1 // pred_region
      _
    $region33: #{tsp_decoder_forward.1} parent=1 // pred_fallthru
      _
    // Predicated region
    $region34: #{tsp_decoder_forward.1} parent=1 // pred_check
      _
    $region35: #{tsp_decoder_forward.1} parent=1 // pred_check_branch
      %37 = sbr.rel (0) target = $region37
    $region36: #{tsp_decoder_forward.1} parent=1 // pred_region
      _
    $region37: #{tsp_decoder_forward.1} parent=1 // pred_fallthru
      _
    // Predicated region
    $region38: #{tsp_decoder_forward.1} parent=1 // pred_check
      _
    $region39: #{tsp_decoder_forward.1} parent=1 // pred_check_branch
      %39 = sbr.rel (0) target = $region41
    $region40: #{tsp_decoder_forward.1} parent=1 // pred_region
      _
    $region41: #{tsp_decoder_forward.1} parent=1 // pred_fallthru
      _
    // Predicated region
    $region42: #{tsp_decoder_forward.1} parent=1 // pred_check
      _
    $region43: #{tsp_decoder_forward.1} parent=1 // pred_check_branch
      %41 = sbr.rel (0) target = $region45
    $region44: #{tsp_decoder_forward.1} parent=1 // pred_region
      _
    $region45: #{tsp_decoder_forward.1} parent=1 // pred_fallthru
      _
    // Predicated region
    $region46: #{tsp_decoder_forward.1} parent=1 // pred_check
      _
    $region47: #{tsp_decoder_forward.1} parent=1 // pred_check_branch
      %43 = sbr.rel (0) target = $region49
    $region48: #{tsp_decoder_forward.1} parent=1 // pred_region
      _
    $region49: #{tsp_decoder_forward.1} parent=1 // pred_fallthru
      _
    %v44 = vld [vmem:[%s0] sm:$0xff]
    %v45 = vld [vmem:[%s0 + $0x8] sm:$0xff]
    %v46 = vld [vmem:[%s2] sm:$0xff]
    %v47 = vld [vmem:[%s2 + $0x8] sm:$0xff]
    %v48 = vld [vmem:[%s2 + $0x10] sm:$0xff]
    %v49 = vld [vmem:[%s2 + $0x18] sm:$0xff]
    %v50 = vld [vmem:[%s3] sm:$0x1]
    %v52 = vlaneseq
    %v53 = vshrl.u32 %v52, 7
    %v54 = vsub.s32 0, %v53
    %v55 = vrot.slane %v50, %v54
    %v59 = vrot.slane %v44, 7
    %v60 = vrot.slane %v45, 6
    %vm61 = vcmask 1041409
    %v62 = vsel %vm61, %v60, %v59
    %vm63 = vcmask 261120
    %v64 = vsel %vm63, %v62, 0
    %66 = vmatprep.subr.mxu0 0.0
    %67 = vmatpush1.msra.mxu0 %v46
    %68 = vmatprep.subr.mxu0 0.0
    %69 = vmatpush1.msra.mxu0 %v47
    %70 = vmatprep.subr.mxu0 0.0
    %71 = vmatpush1.msra.mxu0 %v48
    %72 = vmatprep.subr.mxu0 0.0
    %73 = vmatpush1.msra.mxu0 %v49
    %74 = vmatprep.subr.mxu0 0.0
    %75 = vmatpush1.msra.mxu0 0.0
    %76 = vmatprep.subr.mxu0 0.0
    %77 = vmatpush1.msra.mxu0 0.0
    %78 = vmatprep.subr.mxu0 0.0
    %79 = vmatpush1.msra.mxu0 0.0
    %80 = vmatprep.subr.mxu0 0.0
    %81 = vmatpush1.msra.mxu0 0.0
    %82 = vmatprep.subr.mxu0 0.0
    %83 = vmatpush1.msra.mxu0 0.0
    %84 = vmatprep.subr.mxu0 0.0
    %85 = vmatpush1.msra.mxu0 0.0
    %86 = vmatprep.subr.mxu0 0.0
    %87 = vmatpush1.msra.mxu0 0.0
    %88 = vmatprep.subr.mxu0 0.0
    %89 = vmatpush1.msra.mxu0 0.0
    %90 = vmatprep.subr.mxu0 0.0
    %91 = vmatpush1.msra.mxu0 0.0
    %92 = vmatprep.subr.mxu0 0.0
    %93 = vmatpush1.msra.mxu0 0.0
    %94 = vmatprep.subr.mxu0 0.0
    %95 = vmatpush1.msra.mxu0 0.0
    %96 = vmatprep.subr.mxu0 0.0
    %97 = vmatpush1.msra.mxu0 0.0
    %98 = vmatprep.subr.mxu0 0.0
    %99 = vmatpush1.msra.mxu0 0.0
    %100 = vmatprep.subr.mxu0 0.0
    %101 = vmatpush1.msra.mxu0 0.0
    %102 = vmatprep.subr.mxu0 0.0
    %103 = vmatpush1.msra.mxu0 0.0
    %104 = vmatprep.subr.mxu0 0.0
    %105 = vmatpush1.msra.mxu0 0.0
    %106 = vmatprep.subr.mxu0 0.0
    %107 = vmatpush1.msra.mxu0 0.0
    %108 = vmatprep.subr.mxu0 0.0
    %109 = vmatpush1.msra.mxu0 0.0
    %110 = vmatprep.subr.mxu0 0.0
    %111 = vmatpush1.msra.mxu0 0.0
    %112 = vmatprep.subr.mxu0 0.0
    %113 = vmatpush1.msra.mxu0 0.0
    %114 = vmatprep.subr.mxu0 0.0
    %115 = vmatpush1.msra.mxu0 0.0
    %116 = vmatprep.subr.mxu0 0.0
    %117 = vmatpush1.msra.mxu0 0.0
    %118 = vmatprep.subr.mxu0 0.0
    %119 = vmatpush1.msra.mxu0 0.0
    %120 = vmatprep.subr.mxu0 0.0
    %121 = vmatpush1.msra.mxu0 0.0
    %122 = vmatprep.subr.mxu0 0.0
    %123 = vmatpush1.msra.mxu0 0.0
    %124 = vmatprep.subr.mxu0 0.0
    %125 = vmatpush1.msra.mxu0 0.0
    %126 = vmatprep.subr.mxu0 0.0
    %127 = vmatpush1.msra.mxu0 0.0
    %128 = vmatprep.subr.mxu0 0.0
    %129 = vmatpush1.msra.mxu0 0.0
    %130 = vmatprep.mubr.f32.mxu0 0.0
    %131 = vmatmul.mubr.f32.gmra.mrb[0].mxu0 %v64
    %v132 = vpop.f32.mrb[0].mxu0
    %v133 = vadd.f32 %v55, %v132
    %v134 = vpop.f32.mrb[0].mxu0
    %135 = vdwg.mxu0
    %v136 = vlaneseq
    %v137 = vshrl.u32 %v136, 7
    %vm138 = vcmp.eq.s32.totalorder %v137, 7
    %v141 = vunpack.c.l.s4 1966171168
    %v142 = vunpack.c.0.s8 %v141
    %v143 = vlaneseq
    %v144 = vshrl.u32 %v143, 7
    %v145 = vsub.s32 %v142, %v144
    %v146 = vrot.slane %v133, %v145
    %v147 = vcombine.high %v146, %v146
    %v149 = vunpack.c.l.s4 1966171168
    %v150 = vunpack.c.0.s8 %v149
    %v151 = vlaneseq
    %v152 = vshrl.u32 %v151, 7
    %v153 = vsub.s32 %v150, %v152
    %v154 = vrot.slane %v146, %v153
    %v156 = vunpack.c.l.s4 1966171168
    %v157 = vunpack.c.0.s8 %v156
    %v158 = vlaneseq
    %v159 = vshrl.u32 %v158, 7
    %v160 = vsub.s32 %v157, %v159
    %v161 = vrot.slane %v147, %v160
    %v162 = vlaneseq
    %v163 = vshrl.u32 %v162, 7
    %v164 = vsub.s32 0, %v163
    %v165 = vrot.slane %v154, %v164
    %v166 = vlaneseq
    %v167 = vshrl.u32 %v166, 7
    %v168 = vsub.s32 0, %v167
    %v169 = vrot.slane %v161, %v168
    %v172 = vsel %vm138, %v165, %v44
    %v173 = vsel %vm138, %v169, %v45
    %v174 = vld [vmem:[%s4] sm:$0xff]
    %v175 = vld [vmem:[%s4 + $0x8] sm:$0xff]
    %v176 = vld [vmem:[%s4 + $0x10] sm:$0xff]
    %v177 = vld [vmem:[%s4 + $0x18] sm:$0xff]
    %v178 = vld [vmem:[%s5] sm:$0x1]
    %v179 = vld [vmem:[%s6] sm:$0xff]
    %v180 = vld [vmem:[%s6 + $0x8] sm:$0xff]
    %v181 = vld [vmem:[%s6 + $0x10] sm:$0xff]
    %v182 = vld [vmem:[%s6 + $0x18] sm:$0xff]
    %v183 = vld [vmem:[%s7] sm:$0x1]
    %v184 = vld [vmem:[%s8] sm:$0xff]
    %v185 = vld [vmem:[%s8 + $0x8] sm:$0xff]
    %v186 = vld [vmem:[%s8 + $0x10] sm:$0xff]
    %v187 = vld [vmem:[%s8 + $0x18] sm:$0xff]
    %v188 = vld [vmem:[%s8 + $0x20] sm:$0xff]
    %v189 = vld [vmem:[%s8 + $0x28] sm:$0xff]
    %v190 = vld [vmem:[%s8 + $0x30] sm:$0xff]
    %v191 = vld [vmem:[%s8 + $0x38] sm:$0xff]
    %v192 = vld [vmem:[%s9] sm:$0x1]
    %v194 = vsel %vm63, %v172, 0
    %v197 = vsel %vm63, %v173, 0
    %199 = vmatprep.subr.mxu0 0.0
    %200 = vmatpush1.msra.mxu0 %v174
    %201 = vmatprep.subr.mxu0 0.0
    %202 = vmatpush1.msra.mxu0 %v175
    %203 = vmatprep.subr.mxu0 0.0
    %204 = vmatpush1.msra.mxu0 %v176
    %205 = vmatprep.subr.mxu0 0.0
    %206 = vmatpush1.msra.mxu0 %v177
    %207 = vmatprep.subr.mxu0 0.0
    %208 = vmatpush1.msra.mxu0 0.0
    %209 = vmatprep.subr.mxu0 0.0
    %210 = vmatpush1.msra.mxu0 0.0
    %211 = vmatprep.subr.mxu0 0.0
    %212 = vmatpush1.msra.mxu0 0.0
    %213 = vmatprep.subr.mxu0 0.0
    %214 = vmatpush1.msra.mxu0 0.0
    %215 = vmatprep.subr.mxu0 0.0
    %216 = vmatpush1.msra.mxu0 0.0
    %217 = vmatprep.subr.mxu0 0.0
    %218 = vmatpush1.msra.mxu0 0.0
    %219 = vmatprep.subr.mxu0 0.0
    %220 = vmatpush1.msra.mxu0 0.0
    %221 = vmatprep.subr.mxu0 0.0
    %222 = vmatpush1.msra.mxu0 0.0
    %223 = vmatprep.subr.mxu0 0.0
    %224 = vmatpush1.msra.mxu0 0.0
    %225 = vmatprep.subr.mxu0 0.0
    %226 = vmatpush1.msra.mxu0 0.0
    %227 = vmatprep.subr.mxu0 0.0
    %228 = vmatpush1.msra.mxu0 0.0
    %229 = vmatprep.subr.mxu0 0.0
    %230 = vmatpush1.msra.mxu0 0.0
    %231 = vmatprep.subr.mxu0 0.0
    %232 = vmatpush1.msra.mxu0 0.0
    %233 = vmatprep.subr.mxu0 0.0
    %234 = vmatpush1.msra.mxu0 0.0
    %235 = vmatprep.subr.mxu0 0.0
    %236 = vmatpush1.msra.mxu0 0.0
    %237 = vmatprep.subr.mxu0 0.0
    %238 = vmatpush1.msra.mxu0 0.0
    %239 = vmatprep.subr.mxu0 0.0
    %240 = vmatpush1.msra.mxu0 0.0
    %241 = vmatprep.subr.mxu0 0.0
    %242 = vmatpush1.msra.mxu0 0.0
    %243 = vmatprep.subr.mxu0 0.0
    %244 = vmatpush1.msra.mxu0 0.0
    %245 = vmatprep.subr.mxu0 0.0
    %246 = vmatpush1.msra.mxu0 0.0
    %247 = vmatprep.subr.mxu0 0.0
    %248 = vmatpush1.msra.mxu0 0.0
    %249 = vmatprep.subr.mxu0 0.0
    %250 = vmatpush1.msra.mxu0 0.0
    %251 = vmatprep.subr.mxu0 0.0
    %252 = vmatpush1.msra.mxu0 0.0
    %253 = vmatprep.subr.mxu0 0.0
    %254 = vmatpush1.msra.mxu0 0.0
    %255 = vmatprep.subr.mxu0 0.0
    %256 = vmatpush1.msra.mxu0 0.0
    %257 = vmatprep.subr.mxu0 0.0
    %258 = vmatpush1.msra.mxu0 0.0
    %259 = vmatprep.subr.mxu0 0.0
    %260 = vmatpush1.msra.mxu0 0.0
    %261 = vmatprep.subr.mxu0 0.0
    %262 = vmatpush1.msra.mxu0 0.0
    %263 = vmatprep.mubr.f32.mxu0 0.0
    %264 = vmatmul.mubr.f32.gmra.mrb[0].mxu0 %v194
    %v265 = vpop.f32.mrb[0].mxu0
    %v266 = vadd.f32 0.0, %v265
    %v267 = vpop.f32.mrb[0].mxu0
    %268 = vmatprep.mubr.f32.mxu0 0.0
    %269 = vmatmul.mubr.f32.gmra.mrb[0].mxu0 %v197
    %v270 = vpop.f32.mrb[0].mxu0
    %v271 = vadd.f32 0.0, %v270
    %v272 = vpop.f32.mrb[0].mxu0
    %273 = vdwg.mxu0
    %275 = vrot.lane.b32.xlu0 %v266, 96
    %v276 = vpop.permute.xlu0 %275
    %vm277 = vcmask 130048
    %v278 = vsel %vm277, %v266, 0
    %v280 = vsel %vm277, %v276, 0
    %282 = vmatprep.subr.mxu0 0.0
    %283 = vmatpush1.xpose.msra.mxu0 %v280
    %284 = vmatprep.subr.mxu0 0.0
    %285 = vmatpush1.xpose.msra.mxu0 0.0
    %286 = vmatprep.subr.mxu0 0.0
    %287 = vmatpush1.xpose.msra.mxu0 0.0
    %288 = vmatprep.subr.mxu0 0.0
    %289 = vmatpush1.xpose.msra.mxu0 0.0
    %290 = vmatprep.subr.mxu0 0.0
    %291 = vmatpush1.xpose.msra.mxu0 0.0
    %292 = vmatprep.subr.mxu0 0.0
    %293 = vmatpush1.xpose.msra.mxu0 0.0
    %294 = vmatprep.subr.mxu0 0.0
    %295 = vmatpush1.xpose.msra.mxu0 0.0
    %296 = vmatprep.subr.mxu0 0.0
    %297 = vmatpush1.xpose.msra.mxu0 0.0
    %298 = vmatprep.subr.mxu0 0.0
    %299 = vmatpush1.xpose.msra.mxu0 0.0
    %300 = vmatprep.subr.mxu0 0.0
    %301 = vmatpush1.xpose.msra.mxu0 0.0
    %302 = vmatprep.subr.mxu0 0.0
    %303 = vmatpush1.xpose.msra.mxu0 0.0
    %304 = vmatprep.subr.mxu0 0.0
    %305 = vmatpush1.xpose.msra.mxu0 0.0
    %306 = vmatprep.subr.mxu0 0.0
    %307 = vmatpush1.xpose.msra.mxu0 0.0
    %308 = vmatprep.subr.mxu0 0.0
    %309 = vmatpush1.xpose.msra.mxu0 0.0
    %310 = vmatprep.subr.mxu0 0.0
    %311 = vmatpush1.xpose.msra.mxu0 0.0
    %312 = vmatprep.subr.mxu0 0.0
    %313 = vmatpush1.xpose.msra.mxu0 0.0
    %314 = vmatprep.subr.mxu0 0.0
    %315 = vmatpush1.xpose.msra.mxu0 0.0
    %316 = vmatprep.subr.mxu0 0.0
    %317 = vmatpush1.xpose.msra.mxu0 0.0
    %318 = vmatprep.subr.mxu0 0.0
    %319 = vmatpush1.xpose.msra.mxu0 0.0
    %320 = vmatprep.subr.mxu0 0.0
    %321 = vmatpush1.xpose.msra.mxu0 0.0
    %322 = vmatprep.subr.mxu0 0.0
    %323 = vmatpush1.xpose.msra.mxu0 0.0
    %324 = vmatprep.subr.mxu0 0.0
    %325 = vmatpush1.xpose.msra.mxu0 0.0
    %326 = vmatprep.subr.mxu0 0.0
    %327 = vmatpush1.xpose.msra.mxu0 0.0
    %328 = vmatprep.subr.mxu0 0.0
    %329 = vmatpush1.xpose.msra.mxu0 0.0
    %330 = vmatprep.subr.mxu0 0.0
    %331 = vmatpush1.xpose.msra.mxu0 0.0
    %332 = vmatprep.subr.mxu0 0.0
    %333 = vmatpush1.xpose.msra.mxu0 0.0
    %334 = vmatprep.subr.mxu0 0.0
    %335 = vmatpush1.xpose.msra.mxu0 0.0
    %336 = vmatprep.subr.mxu0 0.0
    %337 = vmatpush1.xpose.msra.mxu0 0.0
    %338 = vmatprep.subr.mxu0 0.0
    %339 = vmatpush1.xpose.msra.mxu0 0.0
    %340 = vmatprep.subr.mxu0 0.0
    %341 = vmatpush1.xpose.msra.mxu0 0.0
    %342 = vmatprep.subr.mxu0 0.0
    %343 = vmatpush1.xpose.msra.mxu0 0.0
    %344 = vmatprep.subr.mxu0 0.0
    %345 = vmatpush1.xpose.msra.mxu0 0.0
    %346 = vmatprep.mubr.f32.mxu0 0.0
    %347 = vmatmul.mubr.f32.gmra.mrb[0].mxu0 %v278
    %v348 = vpop.f32.mrb[0].mxu0
    %v349 = vadd.f32 0.0, %v348
    %v350 = vpop.f32.mrb[0].mxu0
    %351 = vdwg.mxu0
    %353 = vrot.lane.b32.xlu0 %v271, 96
    %v354 = vpop.permute.xlu0 %353
    %v355 = vsel %vm277, %v271, 0
    %v357 = vsel %vm277, %v354, 0
    %359 = vmatprep.subr.mxu0 0.0
    %360 = vmatpush1.xpose.msra.mxu0 %v357
    %361 = vmatprep.subr.mxu0 0.0
    %362 = vmatpush1.xpose.msra.mxu0 0.0
    %363 = vmatprep.subr.mxu0 0.0
    %364 = vmatpush1.xpose.msra.mxu0 0.0
    %365 = vmatprep.subr.mxu0 0.0
    %366 = vmatpush1.xpose.msra.mxu0 0.0
    %367 = vmatprep.subr.mxu0 0.0
    %368 = vmatpush1.xpose.msra.mxu0 0.0
    %369 = vmatprep.subr.mxu0 0.0
    %370 = vmatpush1.xpose.msra.mxu0 0.0
    %371 = vmatprep.subr.mxu0 0.0
    %372 = vmatpush1.xpose.msra.mxu0 0.0
    %373 = vmatprep.subr.mxu0 0.0
    %374 = vmatpush1.xpose.msra.mxu0 0.0
    %375 = vmatprep.subr.mxu0 0.0
    %376 = vmatpush1.xpose.msra.mxu0 0.0
    %377 = vmatprep.subr.mxu0 0.0
    %378 = vmatpush1.xpose.msra.mxu0 0.0
    %379 = vmatprep.subr.mxu0 0.0
    %380 = vmatpush1.xpose.msra.mxu0 0.0
    %381 = vmatprep.subr.mxu0 0.0
    %382 = vmatpush1.xpose.msra.mxu0 0.0
    %383 = vmatprep.subr.mxu0 0.0
    %384 = vmatpush1.xpose.msra.mxu0 0.0
    %385 = vmatprep.subr.mxu0 0.0
    %386 = vmatpush1.xpose.msra.mxu0 0.0
    %387 = vmatprep.subr.mxu0 0.0
    %388 = vmatpush1.xpose.msra.mxu0 0.0
    %389 = vmatprep.subr.mxu0 0.0
    %390 = vmatpush1.xpose.msra.mxu0 0.0
    %391 = vmatprep.subr.mxu0 0.0
    %392 = vmatpush1.xpose.msra.mxu0 0.0
    %393 = vmatprep.subr.mxu0 0.0
    %394 = vmatpush1.xpose.msra.mxu0 0.0
    %395 = vmatprep.subr.mxu0 0.0
    %396 = vmatpush1.xpose.msra.mxu0 0.0
    %397 = vmatprep.subr.mxu0 0.0
    %398 = vmatpush1.xpose.msra.mxu0 0.0
    %399 = vmatprep.subr.mxu0 0.0
    %400 = vmatpush1.xpose.msra.mxu0 0.0
    %401 = vmatprep.subr.mxu0 0.0
    %402 = vmatpush1.xpose.msra.mxu0 0.0
    %403 = vmatprep.subr.mxu0 0.0
    %404 = vmatpush1.xpose.msra.mxu0 0.0
    %405 = vmatprep.subr.mxu0 0.0
    %406 = vmatpush1.xpose.msra.mxu0 0.0
    %407 = vmatprep.subr.mxu0 0.0
    %408 = vmatpush1.xpose.msra.mxu0 0.0
    %409 = vmatprep.subr.mxu0 0.0
    %410 = vmatpush1.xpose.msra.mxu0 0.0
    %411 = vmatprep.subr.mxu0 0.0
    %412 = vmatpush1.xpose.msra.mxu0 0.0
    %413 = vmatprep.subr.mxu0 0.0
    %414 = vmatpush1.xpose.msra.mxu0 0.0
    %415 = vmatprep.subr.mxu0 0.0
    %416 = vmatpush1.xpose.msra.mxu0 0.0
    %417 = vmatprep.subr.mxu0 0.0
    %418 = vmatpush1.xpose.msra.mxu0 0.0
    %419 = vmatprep.subr.mxu0 0.0
    %420 = vmatpush1.xpose.msra.mxu0 0.0
    %421 = vmatprep.subr.mxu0 0.0
    %422 = vmatpush1.xpose.msra.mxu0 0.0
    %423 = vmatprep.mubr.f32.mxu0 0.0
    %424 = vmatmul.mubr.f32.gmra.mrb[0].mxu0 %v355
    %v425 = vpop.f32.mrb[0].mxu0
    %v426 = vadd.f32 0.0, %v425
    %v427 = vpop.f32.mrb[0].mxu0
    %428 = vdwg.mxu0
    %vm429 = vcmask 64512
    %v430 = vsel %vm429, %v349, -inf
    %431 = vmax.xlane.f32.xlu0 %v430
    %v432 = vpop.xlane.xlu0 %431
    %v433 = vsel %vm429, %v426, -inf
    %434 = vmax.xlane.f32.xlu0 %v433
    %v435 = vpop.xlane.xlu0 %434
    %v436 = vsub.f32 %v349, %v432
    %v437 = vsub.f32 %v426, %v435
    %v438 = vmul.f32 %v436, 1.442695
    %v439 = vpow.pop %v438
    %v440 = vmul.f32 %v437, 1.442695
    %v441 = vpow.pop %v440
    %v442 = vsel %vm429, %v439, 0.0
    %443 = vadd.xlane.f32.xlu0 %v442
    %v444 = vpop.xlane.xlu0 %443
    %v445 = vsel %vm429, %v441, 0.0
    %446 = vadd.xlane.f32.xlu0 %v445
    %v447 = vpop.xlane.xlu0 %446
    %v448 = vrcp.pop %v444
    %v449 = vrcp.pop %v447
    %v450 = vmul.f32 %v439, %v448
    %v451 = vmul.f32 %v441, %v449
    %452 = vrot.lane.b32.xlu0 %v266, 112
    %v453 = vpop.permute.xlu0 %452
    %454 = vrot.lane.b32.xlu0 %v266, 80
    %v455 = vpop.permute.xlu0 %454
    %v456 = vsel %vm277, %v453, 0
    %v458 = vsel %vm277, %v455, 0
    %460 = vmatprep.subr.mxu0 0.0
    %461 = vmatpush1.xpose.msra.mxu0 %v458
    %462 = vmatprep.subr.mxu0 0.0
    %463 = vmatpush1.xpose.msra.mxu0 0.0
    %464 = vmatprep.subr.mxu0 0.0
    %465 = vmatpush1.xpose.msra.mxu0 0.0
    %466 = vmatprep.subr.mxu0 0.0
    %467 = vmatpush1.xpose.msra.mxu0 0.0
    %468 = vmatprep.subr.mxu0 0.0
    %469 = vmatpush1.xpose.msra.mxu0 0.0
    %470 = vmatprep.subr.mxu0 0.0
    %471 = vmatpush1.xpose.msra.mxu0 0.0
    %472 = vmatprep.subr.mxu0 0.0
    %473 = vmatpush1.xpose.msra.mxu0 0.0
    %474 = vmatprep.subr.mxu0 0.0
    %475 = vmatpush1.xpose.msra.mxu0 0.0
    %476 = vmatprep.subr.mxu0 0.0
    %477 = vmatpush1.xpose.msra.mxu0 0.0
    %478 = vmatprep.subr.mxu0 0.0
    %479 = vmatpush1.xpose.msra.mxu0 0.0
    %480 = vmatprep.subr.mxu0 0.0
    %481 = vmatpush1.xpose.msra.mxu0 0.0
    %482 = vmatprep.subr.mxu0 0.0
    %483 = vmatpush1.xpose.msra.mxu0 0.0
    %484 = vmatprep.subr.mxu0 0.0
    %485 = vmatpush1.xpose.msra.mxu0 0.0
    %486 = vmatprep.subr.mxu0 0.0
    %487 = vmatpush1.xpose.msra.mxu0 0.0
    %488 = vmatprep.subr.mxu0 0.0
    %489 = vmatpush1.xpose.msra.mxu0 0.0
    %490 = vmatprep.subr.mxu0 0.0
    %491 = vmatpush1.xpose.msra.mxu0 0.0
    %492 = vmatprep.subr.mxu0 0.0
    %493 = vmatpush1.xpose.msra.mxu0 0.0
    %494 = vmatprep.subr.mxu0 0.0
    %495 = vmatpush1.xpose.msra.mxu0 0.0
    %496 = vmatprep.subr.mxu0 0.0
    %497 = vmatpush1.xpose.msra.mxu0 0.0
    %498 = vmatprep.subr.mxu0 0.0
    %499 = vmatpush1.xpose.msra.mxu0 0.0
    %500 = vmatprep.subr.mxu0 0.0
    %501 = vmatpush1.xpose.msra.mxu0 0.0
    %502 = vmatprep.subr.mxu0 0.0
    %503 = vmatpush1.xpose.msra.mxu0 0.0
    %504 = vmatprep.subr.mxu0 0.0
    %505 = vmatpush1.xpose.msra.mxu0 0.0
    %506 = vmatprep.subr.mxu0 0.0
    %507 = vmatpush1.xpose.msra.mxu0 0.0
    %508 = vmatprep.subr.mxu0 0.0
    %509 = vmatpush1.xpose.msra.mxu0 0.0
    %510 = vmatprep.subr.mxu0 0.0
    %511 = vmatpush1.xpose.msra.mxu0 0.0
    %512 = vmatprep.subr.mxu0 0.0
    %513 = vmatpush1.xpose.msra.mxu0 0.0
    %514 = vmatprep.subr.mxu0 0.0
    %515 = vmatpush1.xpose.msra.mxu0 0.0
    %516 = vmatprep.subr.mxu0 0.0
    %517 = vmatpush1.xpose.msra.mxu0 0.0
    %518 = vmatprep.subr.mxu0 0.0
    %519 = vmatpush1.xpose.msra.mxu0 0.0
    %520 = vmatprep.subr.mxu0 0.0
    %521 = vmatpush1.xpose.msra.mxu0 0.0
    %522 = vmatprep.subr.mxu0 0.0
    %523 = vmatpush1.xpose.msra.mxu0 0.0
    %524 = vmatprep.mubr.f32.mxu0 0.0
    %525 = vmatmul.mubr.f32.gmra.mrb[0].mxu0 %v456
    %v526 = vpop.f32.mrb[0].mxu0
    %v527 = vadd.f32 0.0, %v526
    %v528 = vpop.f32.mrb[0].mxu0
    %529 = vdwg.mxu0
    %530 = vrot.lane.b32.xlu0 %v271, 112
    %v531 = vpop.permute.xlu0 %530
    %532 = vrot.lane.b32.xlu0 %v271, 80
    %v533 = vpop.permute.xlu0 %532
    %v534 = vsel %vm277, %v531, 0
    %v536 = vsel %vm277, %v533, 0
    %538 = vmatprep.subr.mxu0 0.0
    %539 = vmatpush1.xpose.msra.mxu0 %v536
    %540 = vmatprep.subr.mxu0 0.0
    %541 = vmatpush1.xpose.msra.mxu0 0.0
    %542 = vmatprep.subr.mxu0 0.0
    %543 = vmatpush1.xpose.msra.mxu0 0.0
    %544 = vmatprep.subr.mxu0 0.0
    %545 = vmatpush1.xpose.msra.mxu0 0.0
    %546 = vmatprep.subr.mxu0 0.0
    %547 = vmatpush1.xpose.msra.mxu0 0.0
    %548 = vmatprep.subr.mxu0 0.0
    %549 = vmatpush1.xpose.msra.mxu0 0.0
    %550 = vmatprep.subr.mxu0 0.0
    %551 = vmatpush1.xpose.msra.mxu0 0.0
    %552 = vmatprep.subr.mxu0 0.0
    %553 = vmatpush1.xpose.msra.mxu0 0.0
    %554 = vmatprep.subr.mxu0 0.0
    %555 = vmatpush1.xpose.msra.mxu0 0.0
    %556 = vmatprep.subr.mxu0 0.0
    %557 = vmatpush1.xpose.msra.mxu0 0.0
    %558 = vmatprep.subr.mxu0 0.0
    %559 = vmatpush1.xpose.msra.mxu0 0.0
    %560 = vmatprep.subr.mxu0 0.0
    %561 = vmatpush1.xpose.msra.mxu0 0.0
    %562 = vmatprep.subr.mxu0 0.0
    %563 = vmatpush1.xpose.msra.mxu0 0.0
    %564 = vmatprep.subr.mxu0 0.0
    %565 = vmatpush1.xpose.msra.mxu0 0.0
    %566 = vmatprep.subr.mxu0 0.0
    %567 = vmatpush1.xpose.msra.mxu0 0.0
    %568 = vmatprep.subr.mxu0 0.0
    %569 = vmatpush1.xpose.msra.mxu0 0.0
    %570 = vmatprep.subr.mxu0 0.0
    %571 = vmatpush1.xpose.msra.mxu0 0.0
    %572 = vmatprep.subr.mxu0 0.0
    %573 = vmatpush1.xpose.msra.mxu0 0.0
    %574 = vmatprep.subr.mxu0 0.0
    %575 = vmatpush1.xpose.msra.mxu0 0.0
    %576 = vmatprep.subr.mxu0 0.0
    %577 = vmatpush1.xpose.msra.mxu0 0.0
    %578 = vmatprep.subr.mxu0 0.0
    %579 = vmatpush1.xpose.msra.mxu0 0.0
    %580 = vmatprep.subr.mxu0 0.0
    %581 = vmatpush1.xpose.msra.mxu0 0.0
    %582 = vmatprep.subr.mxu0 0.0
    %583 = vmatpush1.xpose.msra.mxu0 0.0
    %584 = vmatprep.subr.mxu0 0.0
    %585 = vmatpush1.xpose.msra.mxu0 0.0
    %586 = vmatprep.subr.mxu0 0.0
    %587 = vmatpush1.xpose.msra.mxu0 0.0
    %588 = vmatprep.subr.mxu0 0.0
    %589 = vmatpush1.xpose.msra.mxu0 0.0
    %590 = vmatprep.subr.mxu0 0.0
    %591 = vmatpush1.xpose.msra.mxu0 0.0
    %592 = vmatprep.subr.mxu0 0.0
    %593 = vmatpush1.xpose.msra.mxu0 0.0
    %594 = vmatprep.subr.mxu0 0.0
    %595 = vmatpush1.xpose.msra.mxu0 0.0
    %596 = vmatprep.subr.mxu0 0.0
    %597 = vmatpush1.xpose.msra.mxu0 0.0
    %598 = vmatprep.subr.mxu0 0.0
    %599 = vmatpush1.xpose.msra.mxu0 0.0
    %600 = vmatprep.subr.mxu0 0.0
    %601 = vmatpush1.xpose.msra.mxu0 0.0
    %602 = vmatprep.mubr.f32.mxu0 0.0
    %603 = vmatmul.mubr.f32.gmra.mrb[0].mxu0 %v534
    %v604 = vpop.f32.mrb[0].mxu0
    %v605 = vadd.f32 0.0, %v604
    %v606 = vpop.f32.mrb[0].mxu0
    %607 = vdwg.mxu0
    %v608 = vsel %vm429, %v527, -inf
    %609 = vmax.xlane.f32.xlu0 %v608
    %v610 = vpop.xlane.xlu0 %609
    %v611 = vsel %vm429, %v605, -inf
    %612 = vmax.xlane.f32.xlu0 %v611
    %v613 = vpop.xlane.xlu0 %612
    %v614 = vsub.f32 %v527, %v610
    %v615 = vsub.f32 %v605, %v613
    %v616 = vmul.f32 %v614, 1.442695
    %v617 = vpow.pop %v616
    %v618 = vmul.f32 %v615, 1.442695
    %v619 = vpow.pop %v618
    %v620 = vsel %vm429, %v617, 0.0
    %621 = vadd.xlane.f32.xlu0 %v620
    %v622 = vpop.xlane.xlu0 %621
    %v623 = vsel %vm429, %v619, 0.0
    %624 = vadd.xlane.f32.xlu0 %v623
    %v625 = vpop.xlane.xlu0 %624
    %v626 = vrcp.pop %v622
    %v627 = vrcp.pop %v625
    %v628 = vmul.f32 %v617, %v626
    %v629 = vmul.f32 %v619, %v627
    %630 = vrot.lane.b32.xlu0 %v266, 32
    %v631 = vpop.permute.xlu0 %630
    %v634 = vsel %vm429, %v628, 0
    %636 = vmatprep.subr.mxu0 0.0
    %637 = vmatpush1.msra.mxu0 %v631
    %638 = vmatprep.subr.mxu0 0.0
    %639 = vmatpush1.msra.mxu0 0.0
    %640 = vmatprep.subr.mxu0 0.0
    %641 = vmatpush1.msra.mxu0 0.0
    %642 = vmatprep.subr.mxu0 0.0
    %643 = vmatpush1.msra.mxu0 0.0
    %644 = vmatprep.subr.mxu0 0.0
    %645 = vmatpush1.msra.mxu0 0.0
    %646 = vmatprep.subr.mxu0 0.0
    %647 = vmatpush1.msra.mxu0 0.0
    %648 = vmatprep.subr.mxu0 0.0
    %649 = vmatpush1.msra.mxu0 0.0
    %650 = vmatprep.subr.mxu0 0.0
    %651 = vmatpush1.msra.mxu0 0.0
    %652 = vmatprep.subr.mxu0 0.0
    %653 = vmatpush1.msra.mxu0 0.0
    %654 = vmatprep.subr.mxu0 0.0
    %655 = vmatpush1.msra.mxu0 0.0
    %656 = vmatprep.subr.mxu0 0.0
    %657 = vmatpush1.msra.mxu0 0.0
    %658 = vmatprep.subr.mxu0 0.0
    %659 = vmatpush1.msra.mxu0 0.0
    %660 = vmatprep.subr.mxu0 0.0
    %661 = vmatpush1.msra.mxu0 0.0
    %662 = vmatprep.subr.mxu0 0.0
    %663 = vmatpush1.msra.mxu0 0.0
    %664 = vmatprep.subr.mxu0 0.0
    %665 = vmatpush1.msra.mxu0 0.0
    %666 = vmatprep.subr.mxu0 0.0
    %667 = vmatpush1.msra.mxu0 0.0
    %668 = vmatprep.subr.mxu0 0.0
    %669 = vmatpush1.msra.mxu0 0.0
    %670 = vmatprep.subr.mxu0 0.0
    %671 = vmatpush1.msra.mxu0 0.0
    %672 = vmatprep.subr.mxu0 0.0
    %673 = vmatpush1.msra.mxu0 0.0
    %674 = vmatprep.subr.mxu0 0.0
    %675 = vmatpush1.msra.mxu0 0.0
    %676 = vmatprep.subr.mxu0 0.0
    %677 = vmatpush1.msra.mxu0 0.0
    %678 = vmatprep.subr.mxu0 0.0
    %679 = vmatpush1.msra.mxu0 0.0
    %680 = vmatprep.subr.mxu0 0.0
    %681 = vmatpush1.msra.mxu0 0.0
    %682 = vmatprep.subr.mxu0 0.0
    %683 = vmatpush1.msra.mxu0 0.0
    %684 = vmatprep.subr.mxu0 0.0
    %685 = vmatpush1.msra.mxu0 0.0
    %686 = vmatprep.subr.mxu0 0.0
    %687 = vmatpush1.msra.mxu0 0.0
    %688 = vmatprep.subr.mxu0 0.0
    %689 = vmatpush1.msra.mxu0 0.0
    %690 = vmatprep.subr.mxu0 0.0
    %691 = vmatpush1.msra.mxu0 0.0
    %692 = vmatprep.subr.mxu0 0.0
    %693 = vmatpush1.msra.mxu0 0.0
    %694 = vmatprep.subr.mxu0 0.0
    %695 = vmatpush1.msra.mxu0 0.0
    %696 = vmatprep.subr.mxu0 0.0
    %697 = vmatpush1.msra.mxu0 0.0
    %698 = vmatprep.subr.mxu0 0.0
    %699 = vmatpush1.msra.mxu0 0.0
    %700 = vmatprep.mubr.f32.mxu0 0.0
    %701 = vmatmul.mubr.f32.gmra.mrb[0].mxu0 %v634
    %v702 = vpop.f32.mrb[0].mxu0
    %v703 = vadd.f32 0.0, %v702
    %v704 = vpop.f32.mrb[0].mxu0
    %705 = vdwg.mxu0
    %706 = vrot.lane.b32.xlu0 %v271, 32
    %v707 = vpop.permute.xlu0 %706
    %v710 = vsel %vm429, %v629, 0
    %712 = vmatprep.subr.mxu0 0.0
    %713 = vmatpush1.msra.mxu0 %v707
    %714 = vmatprep.subr.mxu0 0.0
    %715 = vmatpush1.msra.mxu0 0.0
    %716 = vmatprep.subr.mxu0 0.0
    %717 = vmatpush1.msra.mxu0 0.0
    %718 = vmatprep.subr.mxu0 0.0
    %719 = vmatpush1.msra.mxu0 0.0
    %720 = vmatprep.subr.mxu0 0.0
    %721 = vmatpush1.msra.mxu0 0.0
    %722 = vmatprep.subr.mxu0 0.0
    %723 = vmatpush1.msra.mxu0 0.0
    %724 = vmatprep.subr.mxu0 0.0
    %725 = vmatpush1.msra.mxu0 0.0
    %726 = vmatprep.subr.mxu0 0.0
    %727 = vmatpush1.msra.mxu0 0.0
    %728 = vmatprep.subr.mxu0 0.0
    %729 = vmatpush1.msra.mxu0 0.0
    %730 = vmatprep.subr.mxu0 0.0
    %731 = vmatpush1.msra.mxu0 0.0
    %732 = vmatprep.subr.mxu0 0.0
    %733 = vmatpush1.msra.mxu0 0.0
    %734 = vmatprep.subr.mxu0 0.0
    %735 = vmatpush1.msra.mxu0 0.0
    %736 = vmatprep.subr.mxu0 0.0
    %737 = vmatpush1.msra.mxu0 0.0
    %738 = vmatprep.subr.mxu0 0.0
    %739 = vmatpush1.msra.mxu0 0.0
    %740 = vmatprep.subr.mxu0 0.0
    %741 = vmatpush1.msra.mxu0 0.0
    %742 = vmatprep.subr.mxu0 0.0
    %743 = vmatpush1.msra.mxu0 0.0
    %744 = vmatprep.subr.mxu0 0.0
    %745 = vmatpush1.msra.mxu0 0.0
    %746 = vmatprep.subr.mxu0 0.0
    %747 = vmatpush1.msra.mxu0 0.0
    %748 = vmatprep.subr.mxu0 0.0
    %749 = vmatpush1.msra.mxu0 0.0
    %750 = vmatprep.subr.mxu0 0.0
    %751 = vmatpush1.msra.mxu0 0.0
    %752 = vmatprep.subr.mxu0 0.0
    %753 = vmatpush1.msra.mxu0 0.0
    %754 = vmatprep.subr.mxu0 0.0
    %755 = vmatpush1.msra.mxu0 0.0
    %756 = vmatprep.subr.mxu0 0.0
    %757 = vmatpush1.msra.mxu0 0.0
    %758 = vmatprep.subr.mxu0 0.0
    %759 = vmatpush1.msra.mxu0 0.0
    %760 = vmatprep.subr.mxu0 0.0
    %761 = vmatpush1.msra.mxu0 0.0
    %762 = vmatprep.subr.mxu0 0.0
    %763 = vmatpush1.msra.mxu0 0.0
    %764 = vmatprep.subr.mxu0 0.0
    %765 = vmatpush1.msra.mxu0 0.0
    %766 = vmatprep.subr.mxu0 0.0
    %767 = vmatpush1.msra.mxu0 0.0
    %768 = vmatprep.subr.mxu0 0.0
    %769 = vmatpush1.msra.mxu0 0.0
    %770 = vmatprep.subr.mxu0 0.0
    %771 = vmatpush1.msra.mxu0 0.0
    %772 = vmatprep.subr.mxu0 0.0
    %773 = vmatpush1.msra.mxu0 0.0
    %774 = vmatprep.subr.mxu0 0.0
    %775 = vmatpush1.msra.mxu0 0.0
    %776 = vmatprep.mubr.f32.mxu0 0.0
    %777 = vmatmul.mubr.f32.gmra.mrb[0].mxu0 %v710
    %v778 = vpop.f32.mrb[0].mxu0
    %v779 = vadd.f32 0.0, %v778
    %v780 = vpop.f32.mrb[0].mxu0
    %781 = vdwg.mxu0
    %782 = vrot.lane.b32.xlu0 %v266, 64
    %v783 = vpop.permute.xlu0 %782
    %v786 = vsel %vm429, %v450, 0
    %788 = vmatprep.subr.mxu0 0.0
    %789 = vmatpush1.msra.mxu0 %v783
    %790 = vmatprep.subr.mxu0 0.0
    %791 = vmatpush1.msra.mxu0 0.0
    %792 = vmatprep.subr.mxu0 0.0
    %793 = vmatpush1.msra.mxu0 0.0
    %794 = vmatprep.subr.mxu0 0.0
    %795 = vmatpush1.msra.mxu0 0.0
    %796 = vmatprep.subr.mxu0 0.0
    %797 = vmatpush1.msra.mxu0 0.0
    %798 = vmatprep.subr.mxu0 0.0
    %799 = vmatpush1.msra.mxu0 0.0
    %800 = vmatprep.subr.mxu0 0.0
    %801 = vmatpush1.msra.mxu0 0.0
    %802 = vmatprep.subr.mxu0 0.0
    %803 = vmatpush1.msra.mxu0 0.0
    %804 = vmatprep.subr.mxu0 0.0
    %805 = vmatpush1.msra.mxu0 0.0
    %806 = vmatprep.subr.mxu0 0.0
    %807 = vmatpush1.msra.mxu0 0.0
    %808 = vmatprep.subr.mxu0 0.0
    %809 = vmatpush1.msra.mxu0 0.0
    %810 = vmatprep.subr.mxu0 0.0
    %811 = vmatpush1.msra.mxu0 0.0
    %812 = vmatprep.subr.mxu0 0.0
    %813 = vmatpush1.msra.mxu0 0.0
    %814 = vmatprep.subr.mxu0 0.0
    %815 = vmatpush1.msra.mxu0 0.0
    %816 = vmatprep.subr.mxu0 0.0
    %817 = vmatpush1.msra.mxu0 0.0
    %818 = vmatprep.subr.mxu0 0.0
    %819 = vmatpush1.msra.mxu0 0.0
    %820 = vmatprep.subr.mxu0 0.0
    %821 = vmatpush1.msra.mxu0 0.0
    %822 = vmatprep.subr.mxu0 0.0
    %823 = vmatpush1.msra.mxu0 0.0
    %824 = vmatprep.subr.mxu0 0.0
    %825 = vmatpush1.msra.mxu0 0.0
    %826 = vmatprep.subr.mxu0 0.0
    %827 = vmatpush1.msra.mxu0 0.0
    %828 = vmatprep.subr.mxu0 0.0
    %829 = vmatpush1.msra.mxu0 0.0
    %830 = vmatprep.subr.mxu0 0.0
    %831 = vmatpush1.msra.mxu0 0.0
    %832 = vmatprep.subr.mxu0 0.0
    %833 = vmatpush1.msra.mxu0 0.0
    %834 = vmatprep.subr.mxu0 0.0
    %835 = vmatpush1.msra.mxu0 0.0
    %836 = vmatprep.subr.mxu0 0.0
    %837 = vmatpush1.msra.mxu0 0.0
    %838 = vmatprep.subr.mxu0 0.0
    %839 = vmatpush1.msra.mxu0 0.0
    %840 = vmatprep.subr.mxu0 0.0
    %841 = vmatpush1.msra.mxu0 0.0
    %842 = vmatprep.subr.mxu0 0.0
    %843 = vmatpush1.msra.mxu0 0.0
    %844 = vmatprep.subr.mxu0 0.0
    %845 = vmatpush1.msra.mxu0 0.0
    %846 = vmatprep.subr.mxu0 0.0
    %847 = vmatpush1.msra.mxu0 0.0
    %848 = vmatprep.subr.mxu0 0.0
    %849 = vmatpush1.msra.mxu0 0.0
    %850 = vmatprep.subr.mxu0 0.0
    %851 = vmatpush1.msra.mxu0 0.0
    %852 = vmatprep.mubr.f32.mxu0 0.0
    %853 = vmatmul.mubr.f32.gmra.mrb[0].mxu0 %v786
    %v854 = vpop.f32.mrb[0].mxu0
    %v855 = vadd.f32 %v703, %v854
    %v856 = vpop.f32.mrb[0].mxu0
    %857 = vdwg.mxu0
    %858 = vrot.lane.b32.xlu0 %v271, 64
    %v859 = vpop.permute.xlu0 %858
    %v862 = vsel %vm429, %v451, 0
    %864 = vmatprep.subr.mxu0 0.0
    %865 = vmatpush1.msra.mxu0 %v859
    %866 = vmatprep.subr.mxu0 0.0
    %867 = vmatpush1.msra.mxu0 0.0
    %868 = vmatprep.subr.mxu0 0.0
    %869 = vmatpush1.msra.mxu0 0.0
    %870 = vmatprep.subr.mxu0 0.0
    %871 = vmatpush1.msra.mxu0 0.0
    %872 = vmatprep.subr.mxu0 0.0
    %873 = vmatpush1.msra.mxu0 0.0
    %874 = vmatprep.subr.mxu0 0.0
    %875 = vmatpush1.msra.mxu0 0.0
    %876 = vmatprep.subr.mxu0 0.0
    %877 = vmatpush1.msra.mxu0 0.0
    %878 = vmatprep.subr.mxu0 0.0
    %879 = vmatpush1.msra.mxu0 0.0
    %880 = vmatprep.subr.mxu0 0.0
    %881 = vmatpush1.msra.mxu0 0.0
    %882 = vmatprep.subr.mxu0 0.0
    %883 = vmatpush1.msra.mxu0 0.0
    %884 = vmatprep.subr.mxu0 0.0
    %885 = vmatpush1.msra.mxu0 0.0
    %886 = vmatprep.subr.mxu0 0.0
    %887 = vmatpush1.msra.mxu0 0.0
    %888 = vmatprep.subr.mxu0 0.0
    %889 = vmatpush1.msra.mxu0 0.0
    %890 = vmatprep.subr.mxu0 0.0
    %891 = vmatpush1.msra.mxu0 0.0
    %892 = vmatprep.subr.mxu0 0.0
    %893 = vmatpush1.msra.mxu0 0.0
    %894 = vmatprep.subr.mxu0 0.0
    %895 = vmatpush1.msra.mxu0 0.0
    %896 = vmatprep.subr.mxu0 0.0
    %897 = vmatpush1.msra.mxu0 0.0
    %898 = vmatprep.subr.mxu0 0.0
    %899 = vmatpush1.msra.mxu0 0.0
    %900 = vmatprep.subr.mxu0 0.0
    %901 = vmatpush1.msra.mxu0 0.0
    %902 = vmatprep.subr.mxu0 0.0
    %903 = vmatpush1.msra.mxu0 0.0
    %904 = vmatprep.subr.mxu0 0.0
    %905 = vmatpush1.msra.mxu0 0.0
    %906 = vmatprep.subr.mxu0 0.0
    %907 = vmatpush1.msra.mxu0 0.0
    %908 = vmatprep.subr.mxu0 0.0
    %909 = vmatpush1.msra.mxu0 0.0
    %910 = vmatprep.subr.mxu0 0.0
    %911 = vmatpush1.msra.mxu0 0.0
    %912 = vmatprep.subr.mxu0 0.0
    %913 = vmatpush1.msra.mxu0 0.0
    %914 = vmatprep.subr.mxu0 0.0
    %915 = vmatpush1.msra.mxu0 0.0
    %916 = vmatprep.subr.mxu0 0.0
    %917 = vmatpush1.msra.mxu0 0.0
    %918 = vmatprep.subr.mxu0 0.0
    %919 = vmatpush1.msra.mxu0 0.0
    %920 = vmatprep.subr.mxu0 0.0
    %921 = vmatpush1.msra.mxu0 0.0
    %922 = vmatprep.subr.mxu0 0.0
    %923 = vmatpush1.msra.mxu0 0.0
    %924 = vmatprep.subr.mxu0 0.0
    %925 = vmatpush1.msra.mxu0 0.0
    %926 = vmatprep.subr.mxu0 0.0
    %927 = vmatpush1.msra.mxu0 0.0
    %928 = vmatprep.mubr.f32.mxu0 0.0
    %929 = vmatmul.mubr.f32.gmra.mrb[0].mxu0 %v862
    %v930 = vpop.f32.mrb[0].mxu0
    %v931 = vadd.f32 %v779, %v930
    %v932 = vpop.f32.mrb[0].mxu0
    %933 = vdwg.mxu0
    %v934 = vadd.f32 %v172, %v855
    %v935 = vadd.f32 %v173, %v931
    %v937 = vlaneseq
    %v938 = vshrl.u32 %v937, 7
    %v939 = vsub.s32 0, %v938
    %v940 = vrot.slane %v178, %v939
    %v942 = vadd.f32 %v934, %v940
    %v943 = vadd.f32 %v935, %v940
    %v945 = vlaneseq
    %v946 = vshrl.u32 %v945, 7
    %v947 = vsub.s32 0, %v946
    %v948 = vrot.slane %v183, %v947
    %v951 = vsel %vm63, %v942, 0
    %v954 = vsel %vm63, %v943, 0
    %956 = vmatprep.subr.mxu0 0.0
    %957 = vmatpush1.msra.mxu0 %v179
    %958 = vmatprep.subr.mxu0 0.0
    %959 = vmatpush1.msra.mxu0 %v180
    %960 = vmatprep.subr.mxu0 0.0
    %961 = vmatpush1.msra.mxu0 %v181
    %962 = vmatprep.subr.mxu0 0.0
    %963 = vmatpush1.msra.mxu0 %v182
    %964 = vmatprep.subr.mxu0 0.0
    %965 = vmatpush1.msra.mxu0 0.0
    %966 = vmatprep.subr.mxu0 0.0
    %967 = vmatpush1.msra.mxu0 0.0
    %968 = vmatprep.subr.mxu0 0.0
    %969 = vmatpush1.msra.mxu0 0.0
    %970 = vmatprep.subr.mxu0 0.0
    %971 = vmatpush1.msra.mxu0 0.0
    %972 = vmatprep.subr.mxu0 0.0
    %973 = vmatpush1.msra.mxu0 0.0
    %974 = vmatprep.subr.mxu0 0.0
    %975 = vmatpush1.msra.mxu0 0.0
    %976 = vmatprep.subr.mxu0 0.0
    %977 = vmatpush1.msra.mxu0 0.0
    %978 = vmatprep.subr.mxu0 0.0
    %979 = vmatpush1.msra.mxu0 0.0
    %980 = vmatprep.subr.mxu0 0.0
    %981 = vmatpush1.msra.mxu0 0.0
    %982 = vmatprep.subr.mxu0 0.0
    %983 = vmatpush1.msra.mxu0 0.0
    %984 = vmatprep.subr.mxu0 0.0
    %985 = vmatpush1.msra.mxu0 0.0
    %986 = vmatprep.subr.mxu0 0.0
    %987 = vmatpush1.msra.mxu0 0.0
    %988 = vmatprep.subr.mxu0 0.0
    %989 = vmatpush1.msra.mxu0 0.0
    %990 = vmatprep.subr.mxu0 0.0
    %991 = vmatpush1.msra.mxu0 0.0
    %992 = vmatprep.subr.mxu0 0.0
    %993 = vmatpush1.msra.mxu0 0.0
    %994 = vmatprep.subr.mxu0 0.0
    %995 = vmatpush1.msra.mxu0 0.0
    %996 = vmatprep.subr.mxu0 0.0
    %997 = vmatpush1.msra.mxu0 0.0
    %998 = vmatprep.subr.mxu0 0.0
    %999 = vmatpush1.msra.mxu0 0.0
    %1000 = vmatprep.subr.mxu0 0.0
    %1001 = vmatpush1.msra.mxu0 0.0
    %1002 = vmatprep.subr.mxu0 0.0
    %1003 = vmatpush1.msra.mxu0 0.0
    %1004 = vmatprep.subr.mxu0 0.0
    %1005 = vmatpush1.msra.mxu0 0.0
    %1006 = vmatprep.subr.mxu0 0.0
    %1007 = vmatpush1.msra.mxu0 0.0
    %1008 = vmatprep.subr.mxu0 0.0
    %1009 = vmatpush1.msra.mxu0 0.0
    %1010 = vmatprep.subr.mxu0 0.0
    %1011 = vmatpush1.msra.mxu0 0.0
    %1012 = vmatprep.subr.mxu0 0.0
    %1013 = vmatpush1.msra.mxu0 0.0
    %1014 = vmatprep.subr.mxu0 0.0
    %1015 = vmatpush1.msra.mxu0 0.0
    %1016 = vmatprep.subr.mxu0 0.0
    %1017 = vmatpush1.msra.mxu0 0.0
    %1018 = vmatprep.subr.mxu0 0.0
    %1019 = vmatpush1.msra.mxu0 0.0
    %1020 = vmatprep.mubr.f32.mxu0 0.0
    %1021 = vmatmul.mubr.f32.gmra.mrb[0].mxu0 %v951
    %v1022 = vpop.f32.mrb[0].mxu0
    %v1023 = vadd.f32 %v948, %v1022
    %v1024 = vpop.f32.mrb[0].mxu0
    %1025 = vmatprep.mubr.f32.mxu0 0.0
    %1026 = vmatmul.mubr.f32.gmra.mrb[0].mxu0 %v954
    %v1027 = vpop.f32.mrb[0].mxu0
    %v1028 = vadd.f32 %v948, %v1027
    %v1029 = vpop.f32.mrb[0].mxu0
    %1030 = vdwg.mxu0
    %v1031 = vmax.f32 %v1023, 0.0
    %v1032 = vmax.f32 %v1028, 0.0
    %v1034 = vlaneseq
    %v1035 = vshrl.u32 %v1034, 7
    %v1036 = vsub.s32 0, %v1035
    %v1037 = vrot.slane %v192, %v1036
    %vm1039 = vcmask 523264
    %v1041 = vsel %vm1039, %v1031, 0
    %v1044 = vsel %vm1039, %v1032, 0
    %1046 = vmatprep.subr.mxu0 0.0
    %1047 = vmatpush1.msra.mxu0 %v184
    %1048 = vmatprep.subr.mxu0 0.0
    %1049 = vmatpush1.msra.mxu0 %v185
    %1050 = vmatprep.subr.mxu0 0.0
    %1051 = vmatpush1.msra.mxu0 %v186
    %1052 = vmatprep.subr.mxu0 0.0
    %1053 = vmatpush1.msra.mxu0 %v187
    %1054 = vmatprep.subr.mxu0 0.0
    %1055 = vmatpush1.msra.mxu0 %v188
    %1056 = vmatprep.subr.mxu0 0.0
    %1057 = vmatpush1.msra.mxu0 %v189
    %1058 = vmatprep.subr.mxu0 0.0
    %1059 = vmatpush1.msra.mxu0 %v190
    %1060 = vmatprep.subr.mxu0 0.0
    %1061 = vmatpush1.msra.mxu0 %v191
    %1062 = vmatprep.subr.mxu0 0.0
    %1063 = vmatpush1.msra.mxu0 0.0
    %1064 = vmatprep.subr.mxu0 0.0
    %1065 = vmatpush1.msra.mxu0 0.0
    %1066 = vmatprep.subr.mxu0 0.0
    %1067 = vmatpush1.msra.mxu0 0.0
    %1068 = vmatprep.subr.mxu0 0.0
    %1069 = vmatpush1.msra.mxu0 0.0
    %1070 = vmatprep.subr.mxu0 0.0
    %1071 = vmatpush1.msra.mxu0 0.0
    %1072 = vmatprep.subr.mxu0 0.0
    %1073 = vmatpush1.msra.mxu0 0.0
    %1074 = vmatprep.subr.mxu0 0.0
    %1075 = vmatpush1.msra.mxu0 0.0
    %1076 = vmatprep.subr.mxu0 0.0
    %1077 = vmatpush1.msra.mxu0 0.0
    %1078 = vmatprep.subr.mxu0 0.0
    %1079 = vmatpush1.msra.mxu0 0.0
    %1080 = vmatprep.subr.mxu0 0.0
    %1081 = vmatpush1.msra.mxu0 0.0
    %1082 = vmatprep.subr.mxu0 0.0
    %1083 = vmatpush1.msra.mxu0 0.0
    %1084 = vmatprep.subr.mxu0 0.0
    %1085 = vmatpush1.msra.mxu0 0.0
    %1086 = vmatprep.subr.mxu0 0.0
    %1087 = vmatpush1.msra.mxu0 0.0
    %1088 = vmatprep.subr.mxu0 0.0
    %1089 = vmatpush1.msra.mxu0 0.0
    %1090 = vmatprep.subr.mxu0 0.0
    %1091 = vmatpush1.msra.mxu0 0.0
    %1092 = vmatprep.subr.mxu0 0.0
    %1093 = vmatpush1.msra.mxu0 0.0
    %1094 = vmatprep.subr.mxu0 0.0
    %1095 = vmatpush1.msra.mxu0 0.0
    %1096 = vmatprep.subr.mxu0 0.0
    %1097 = vmatpush1.msra.mxu0 0.0
    %1098 = vmatprep.subr.mxu0 0.0
    %1099 = vmatpush1.msra.mxu0 0.0
    %1100 = vmatprep.subr.mxu0 0.0
    %1101 = vmatpush1.msra.mxu0 0.0
    %1102 = vmatprep.subr.mxu0 0.0
    %1103 = vmatpush1.msra.mxu0 0.0
    %1104 = vmatprep.subr.mxu0 0.0
    %1105 = vmatpush1.msra.mxu0 0.0
    %1106 = vmatprep.subr.mxu0 0.0
    %1107 = vmatpush1.msra.mxu0 0.0
    %1108 = vmatprep.subr.mxu0 0.0
    %1109 = vmatpush1.msra.mxu0 0.0
    %1110 = vmatprep.mubr.f32.mxu0 0.0
    %1111 = vmatmul.mubr.f32.gmra.mrb[0].mxu0 %v1041
    %v1112 = vpop.f32.mrb[0].mxu0
    %v1113 = vadd.f32 %v1037, %v1112
    %v1114 = vpop.f32.mrb[0].mxu0
    %1115 = vmatprep.mubr.f32.mxu0 0.0
    %1116 = vmatmul.mubr.f32.gmra.mrb[0].mxu0 %v1044
    %v1117 = vpop.f32.mrb[0].mxu0
    %v1118 = vadd.f32 %v1037, %v1117
    %v1119 = vpop.f32.mrb[0].mxu0
    %1120 = vdwg.mxu0
    %v1121 = vadd.f32 %v942, %v1113
    %v1122 = vadd.f32 %v943, %v1118
    %s1123 = scalar_lea.vmem %s4, 32
    %v1124 = vld [vmem:[%s1123] sm:$0xff]
    %v1125 = vld [vmem:[%s1123 + $0x8] sm:$0xff]
    %v1126 = vld [vmem:[%s1123 + $0x10] sm:$0xff]
    %v1127 = vld [vmem:[%s1123 + $0x18] sm:$0xff]
    %s1128 = scalar_lea.vmem %s5, 1
    %v1129 = vld [vmem:[%s1128] sm:$0x1]
    %s1130 = scalar_lea.vmem %s6, 32
    %v1131 = vld [vmem:[%s1130] sm:$0xff]
    %v1132 = vld [vmem:[%s1130 + $0x8] sm:$0xff]
    %v1133 = vld [vmem:[%s1130 + $0x10] sm:$0xff]
    %v1134 = vld [vmem:[%s1130 + $0x18] sm:$0xff]
    %s1135 = scalar_lea.vmem %s7, 1
    %v1136 = vld [vmem:[%s1135] sm:$0x1]
    %s1137 = scalar_lea.vmem %s8, 64
    %v1138 = vld [vmem:[%s1137] sm:$0xff]
    %v1139 = vld [vmem:[%s1137 + $0x8] sm:$0xff]
    %v1140 = vld [vmem:[%s1137 + $0x10] sm:$0xff]
    %v1141 = vld [vmem:[%s1137 + $0x18] sm:$0xff]
    %v1142 = vld [vmem:[%s1137 + $0x20] sm:$0xff]
    %v1143 = vld [vmem:[%s1137 + $0x28] sm:$0xff]
    %v1144 = vld [vmem:[%s1137 + $0x30] sm:$0xff]
    %v1145 = vld [vmem:[%s1137 + $0x38] sm:$0xff]
    %s1146 = scalar_lea.vmem %s9, 1
    %v1147 = vld [vmem:[%s1146] sm:$0x1]
    %v1149 = vsel %vm63, %v1121, 0
    %v1152 = vsel %vm63, %v1122, 0
    %1154 = vmatprep.subr.mxu0 0.0
    %1155 = vmatpush1.msra.mxu0 %v1124
    %1156 = vmatprep.subr.mxu0 0.0
    %1157 = vmatpush1.msra.mxu0 %v1125
    %1158 = vmatprep.subr.mxu0 0.0
    %1159 = vmatpush1.msra.mxu0 %v1126
    %1160 = vmatprep.subr.mxu0 0.0
    %1161 = vmatpush1.msra.mxu0 %v1127
    %1162 = vmatprep.subr.mxu0 0.0
    %1163 = vmatpush1.msra.mxu0 0.0
    %1164 = vmatprep.subr.mxu0 0.0
    %1165 = vmatpush1.msra.mxu0 0.0
    %1166 = vmatprep.subr.mxu0 0.0
    %1167 = vmatpush1.msra.mxu0 0.0
    %1168 = vmatprep.subr.mxu0 0.0
    %1169 = vmatpush1.msra.mxu0 0.0
    %1170 = vmatprep.subr.mxu0 0.0
    %1171 = vmatpush1.msra.mxu0 0.0
    %1172 = vmatprep.subr.mxu0 0.0
    %1173 = vmatpush1.msra.mxu0 0.0
    %1174 = vmatprep.subr.mxu0 0.0
    %1175 = vmatpush1.msra.mxu0 0.0
    %1176 = vmatprep.subr.mxu0 0.0
    %1177 = vmatpush1.msra.mxu0 0.0
    %1178 = vmatprep.subr.mxu0 0.0
    %1179 = vmatpush1.msra.mxu0 0.0
    %1180 = vmatprep.subr.mxu0 0.0
    %1181 = vmatpush1.msra.mxu0 0.0
    %1182 = vmatprep.subr.mxu0 0.0
    %1183 = vmatpush1.msra.mxu0 0.0
    %1184 = vmatprep.subr.mxu0 0.0
    %1185 = vmatpush1.msra.mxu0 0.0
    %1186 = vmatprep.subr.mxu0 0.0
    %1187 = vmatpush1.msra.mxu0 0.0
    %1188 = vmatprep.subr.mxu0 0.0
    %1189 = vmatpush1.msra.mxu0 0.0
    %1190 = vmatprep.subr.mxu0 0.0
    %1191 = vmatpush1.msra.mxu0 0.0
    %1192 = vmatprep.subr.mxu0 0.0
    %1193 = vmatpush1.msra.mxu0 0.0
    %1194 = vmatprep.subr.mxu0 0.0
    %1195 = vmatpush1.msra.mxu0 0.0
    %1196 = vmatprep.subr.mxu0 0.0
    %1197 = vmatpush1.msra.mxu0 0.0
    %1198 = vmatprep.subr.mxu0 0.0
    %1199 = vmatpush1.msra.mxu0 0.0
    %1200 = vmatprep.subr.mxu0 0.0
    %1201 = vmatpush1.msra.mxu0 0.0
    %1202 = vmatprep.subr.mxu0 0.0
    %1203 = vmatpush1.msra.mxu0 0.0
    %1204 = vmatprep.subr.mxu0 0.0
    %1205 = vmatpush1.msra.mxu0 0.0
    %1206 = vmatprep.subr.mxu0 0.0
    %1207 = vmatpush1.msra.mxu0 0.0
    %1208 = vmatprep.subr.mxu0 0.0
    %1209 = vmatpush1.msra.mxu0 0.0
    %1210 = vmatprep.subr.mxu0 0.0
    %1211 = vmatpush1.msra.mxu0 0.0
    %1212 = vmatprep.subr.mxu0 0.0
    %1213 = vmatpush1.msra.mxu0 0.0
    %1214 = vmatprep.subr.mxu0 0.0
    %1215 = vmatpush1.msra.mxu0 0.0
    %1216 = vmatprep.subr.mxu0 0.0
    %1217 = vmatpush1.msra.mxu0 0.0
    %1218 = vmatprep.mubr.f32.mxu0 0.0
    %1219 = vmatmul.mubr.f32.gmra.mrb[0].mxu0 %v1149
    %v1220 = vpop.f32.mrb[0].mxu0
    %v1221 = vadd.f32 0.0, %v1220
    %v1222 = vpop.f32.mrb[0].mxu0
    %1223 = vmatprep.mubr.f32.mxu0 0.0
    %1224 = vmatmul.mubr.f32.gmra.mrb[0].mxu0 %v1152
    %v1225 = vpop.f32.mrb[0].mxu0
    %v1226 = vadd.f32 0.0, %v1225
    %v1227 = vpop.f32.mrb[0].mxu0
    %1228 = vdwg.mxu0
    %1230 = vrot.lane.b32.xlu0 %v1221, 96
    %v1231 = vpop.permute.xlu0 %1230
    %v1232 = vsel %vm277, %v1221, 0
    %v1234 = vsel %vm277, %v1231, 0
    %1236 = vmatprep.subr.mxu0 0.0
    %1237 = vmatpush1.xpose.msra.mxu0 %v1234
    %1238 = vmatprep.subr.mxu0 0.0
    %1239 = vmatpush1.xpose.msra.mxu0 0.0
    %1240 = vmatprep.subr.mxu0 0.0
    %1241 = vmatpush1.xpose.msra.mxu0 0.0
    %1242 = vmatprep.subr.mxu0 0.0
    %1243 = vmatpush1.xpose.msra.mxu0 0.0
    %1244 = vmatprep.subr.mxu0 0.0
    %1245 = vmatpush1.xpose.msra.mxu0 0.0
    %1246 = vmatprep.subr.mxu0 0.0
    %1247 = vmatpush1.xpose.msra.mxu0 0.0
    %1248 = vmatprep.subr.mxu0 0.0
    %1249 = vmatpush1.xpose.msra.mxu0 0.0
    %1250 = vmatprep.subr.mxu0 0.0
    %1251 = vmatpush1.xpose.msra.mxu0 0.0
    %1252 = vmatprep.subr.mxu0 0.0
    %1253 = vmatpush1.xpose.msra.mxu0 0.0
    %1254 = vmatprep.subr.mxu0 0.0
    %1255 = vmatpush1.xpose.msra.mxu0 0.0
    %1256 = vmatprep.subr.mxu0 0.0
    %1257 = vmatpush1.xpose.msra.mxu0 0.0
    %1258 = vmatprep.subr.mxu0 0.0
    %1259 = vmatpush1.xpose.msra.mxu0 0.0
    %1260 = vmatprep.subr.mxu0 0.0
    %1261 = vmatpush1.xpose.msra.mxu0 0.0
    %1262 = vmatprep.subr.mxu0 0.0
    %1263 = vmatpush1.xpose.msra.mxu0 0.0
    %1264 = vmatprep.subr.mxu0 0.0
    %1265 = vmatpush1.xpose.msra.mxu0 0.0
    %1266 = vmatprep.subr.mxu0 0.0
    %1267 = vmatpush1.xpose.msra.mxu0 0.0
    %1268 = vmatprep.subr.mxu0 0.0
    %1269 = vmatpush1.xpose.msra.mxu0 0.0
    %1270 = vmatprep.subr.mxu0 0.0
    %1271 = vmatpush1.xpose.msra.mxu0 0.0
    %1272 = vmatprep.subr.mxu0 0.0
    %1273 = vmatpush1.xpose.msra.mxu0 0.0
    %1274 = vmatprep.subr.mxu0 0.0
    %1275 = vmatpush1.xpose.msra.mxu0 0.0
    %1276 = vmatprep.subr.mxu0 0.0
    %1277 = vmatpush1.xpose.msra.mxu0 0.0
    %1278 = vmatprep.subr.mxu0 0.0
    %1279 = vmatpush1.xpose.msra.mxu0 0.0
    %1280 = vmatprep.subr.mxu0 0.0
    %1281 = vmatpush1.xpose.msra.mxu0 0.0
    %1282 = vmatprep.subr.mxu0 0.0
    %1283 = vmatpush1.xpose.msra.mxu0 0.0
    %1284 = vmatprep.subr.mxu0 0.0
    %1285 = vmatpush1.xpose.msra.mxu0 0.0
    %1286 = vmatprep.subr.mxu0 0.0
    %1287 = vmatpush1.xpose.msra.mxu0 0.0
    %1288 = vmatprep.subr.mxu0 0.0
    %1289 = vmatpush1.xpose.msra.mxu0 0.0
    %1290 = vmatprep.subr.mxu0 0.0
    %1291 = vmatpush1.xpose.msra.mxu0 0.0
    %1292 = vmatprep.subr.mxu0 0.0
    %1293 = vmatpush1.xpose.msra.mxu0 0.0
    %1294 = vmatprep.subr.mxu0 0.0
    %1295 = vmatpush1.xpose.msra.mxu0 0.0
    %1296 = vmatprep.subr.mxu0 0.0
    %1297 = vmatpush1.xpose.msra.mxu0 0.0
    %1298 = vmatprep.subr.mxu0 0.0
    %1299 = vmatpush1.xpose.msra.mxu0 0.0
    %1300 = vmatprep.mubr.f32.mxu0 0.0
    %1301 = vmatmul.mubr.f32.gmra.mrb[0].mxu0 %v1232
    %v1302 = vpop.f32.mrb[0].mxu0
    %v1303 = vadd.f32 0.0, %v1302
    %v1304 = vpop.f32.mrb[0].mxu0
    %1305 = vdwg.mxu0
    %1307 = vrot.lane.b32.xlu0 %v1226, 96
    %v1308 = vpop.permute.xlu0 %1307
    %v1309 = vsel %vm277, %v1226, 0
    %v1311 = vsel %vm277, %v1308, 0
    %1313 = vmatprep.subr.mxu0 0.0
    %1314 = vmatpush1.xpose.msra.mxu0 %v1311
    %1315 = vmatprep.subr.mxu0 0.0
    %1316 = vmatpush1.xpose.msra.mxu0 0.0
    %1317 = vmatprep.subr.mxu0 0.0
    %1318 = vmatpush1.xpose.msra.mxu0 0.0
    %1319 = vmatprep.subr.mxu0 0.0
    %1320 = vmatpush1.xpose.msra.mxu0 0.0
    %1321 = vmatprep.subr.mxu0 0.0
    %1322 = vmatpush1.xpose.msra.mxu0 0.0
    %1323 = vmatprep.subr.mxu0 0.0
    %1324 = vmatpush1.xpose.msra.mxu0 0.0
    %1325 = vmatprep.subr.mxu0 0.0
    %1326 = vmatpush1.xpose.msra.mxu0 0.0
    %1327 = vmatprep.subr.mxu0 0.0
    %1328 = vmatpush1.xpose.msra.mxu0 0.0
    %1329 = vmatprep.subr.mxu0 0.0
    %1330 = vmatpush1.xpose.msra.mxu0 0.0
    %1331 = vmatprep.subr.mxu0 0.0
    %1332 = vmatpush1.xpose.msra.mxu0 0.0
    %1333 = vmatprep.subr.mxu0 0.0
    %1334 = vmatpush1.xpose.msra.mxu0 0.0
    %1335 = vmatprep.subr.mxu0 0.0
    %1336 = vmatpush1.xpose.msra.mxu0 0.0
    %1337 = vmatprep.subr.mxu0 0.0
    %1338 = vmatpush1.xpose.msra.mxu0 0.0
    %1339 = vmatprep.subr.mxu0 0.0
    %1340 = vmatpush1.xpose.msra.mxu0 0.0
    %1341 = vmatprep.subr.mxu0 0.0
    %1342 = vmatpush1.xpose.msra.mxu0 0.0
    %1343 = vmatprep.subr.mxu0 0.0
    %1344 = vmatpush1.xpose.msra.mxu0 0.0
    %1345 = vmatprep.subr.mxu0 0.0
    %1346 = vmatpush1.xpose.msra.mxu0 0.0
    %1347 = vmatprep.subr.mxu0 0.0
    %1348 = vmatpush1.xpose.msra.mxu0 0.0
    %1349 = vmatprep.subr.mxu0 0.0
    %1350 = vmatpush1.xpose.msra.mxu0 0.0
    %1351 = vmatprep.subr.mxu0 0.0
    %1352 = vmatpush1.xpose.msra.mxu0 0.0
    %1353 = vmatprep.subr.mxu0 0.0
    %1354 = vmatpush1.xpose.msra.mxu0 0.0
    %1355 = vmatprep.subr.mxu0 0.0
    %1356 = vmatpush1.xpose.msra.mxu0 0.0
    %1357 = vmatprep.subr.mxu0 0.0
    %1358 = vmatpush1.xpose.msra.mxu0 0.0
    %1359 = vmatprep.subr.mxu0 0.0
    %1360 = vmatpush1.xpose.msra.mxu0 0.0
    %1361 = vmatprep.subr.mxu0 0.0
    %1362 = vmatpush1.xpose.msra.mxu0 0.0
    %1363 = vmatprep.subr.mxu0 0.0
    %1364 = vmatpush1.xpose.msra.mxu0 0.0
    %1365 = vmatprep.subr.mxu0 0.0
    %1366 = vmatpush1.xpose.msra.mxu0 0.0
    %1367 = vmatprep.subr.mxu0 0.0
    %1368 = vmatpush1.xpose.msra.mxu0 0.0
    %1369 = vmatprep.subr.mxu0 0.0
    %1370 = vmatpush1.xpose.msra.mxu0 0.0
    %1371 = vmatprep.subr.mxu0 0.0
    %1372 = vmatpush1.xpose.msra.mxu0 0.0
    %1373 = vmatprep.subr.mxu0 0.0
    %1374 = vmatpush1.xpose.msra.mxu0 0.0
    %1375 = vmatprep.subr.mxu0 0.0
    %1376 = vmatpush1.xpose.msra.mxu0 0.0
    %1377 = vmatprep.mubr.f32.mxu0 0.0
    %1378 = vmatmul.mubr.f32.gmra.mrb[0].mxu0 %v1309
    %v1379 = vpop.f32.mrb[0].mxu0
    %v1380 = vadd.f32 0.0, %v1379
    %v1381 = vpop.f32.mrb[0].mxu0
    %1382 = vdwg.mxu0
    %v1383 = vsel %vm429, %v1303, -inf
    %1384 = vmax.xlane.f32.xlu0 %v1383
    %v1385 = vpop.xlane.xlu0 %1384
    %v1386 = vsel %vm429, %v1380, -inf
    %1387 = vmax.xlane.f32.xlu0 %v1386
    %v1388 = vpop.xlane.xlu0 %1387
    %v1389 = vsub.f32 %v1303, %v1385
    %v1390 = vsub.f32 %v1380, %v1388
    %v1391 = vmul.f32 %v1389, 1.442695
    %v1392 = vpow.pop %v1391
    %v1393 = vmul.f32 %v1390, 1.442695
    %v1394 = vpow.pop %v1393
    %v1395 = vsel %vm429, %v1392, 0.0
    %1396 = vadd.xlane.f32.xlu0 %v1395
    %v1397 = vpop.xlane.xlu0 %1396
    %v1398 = vsel %vm429, %v1394, 0.0
    %1399 = vadd.xlane.f32.xlu0 %v1398
    %v1400 = vpop.xlane.xlu0 %1399
    %v1401 = vrcp.pop %v1397
    %v1402 = vrcp.pop %v1400
    %v1403 = vmul.f32 %v1392, %v1401
    %v1404 = vmul.f32 %v1394, %v1402
    %1405 = vrot.lane.b32.xlu0 %v1221, 112
    %v1406 = vpop.permute.xlu0 %1405
    %1407 = vrot.lane.b32.xlu0 %v1221, 80
    %v1408 = vpop.permute.xlu0 %1407
    %v1409 = vsel %vm277, %v1406, 0
    %v1411 = vsel %vm277, %v1408, 0
    %1413 = vmatprep.subr.mxu0 0.0
    %1414 = vmatpush1.xpose.msra.mxu0 %v1411
    %1415 = vmatprep.subr.mxu0 0.0
    %1416 = vmatpush1.xpose.msra.mxu0 0.0
    %1417 = vmatprep.subr.mxu0 0.0
    %1418 = vmatpush1.xpose.msra.mxu0 0.0
    %1419 = vmatprep.subr.mxu0 0.0
    %1420 = vmatpush1.xpose.msra.mxu0 0.0
    %1421 = vmatprep.subr.mxu0 0.0
    %1422 = vmatpush1.xpose.msra.mxu0 0.0
    %1423 = vmatprep.subr.mxu0 0.0
    %1424 = vmatpush1.xpose.msra.mxu0 0.0
    %1425 = vmatprep.subr.mxu0 0.0
    %1426 = vmatpush1.xpose.msra.mxu0 0.0
    %1427 = vmatprep.subr.mxu0 0.0
    %1428 = vmatpush1.xpose.msra.mxu0 0.0
    %1429 = vmatprep.subr.mxu0 0.0
    %1430 = vmatpush1.xpose.msra.mxu0 0.0
    %1431 = vmatprep.subr.mxu0 0.0
    %1432 = vmatpush1.xpose.msra.mxu0 0.0
    %1433 = vmatprep.subr.mxu0 0.0
    %1434 = vmatpush1.xpose.msra.mxu0 0.0
    %1435 = vmatprep.subr.mxu0 0.0
    %1436 = vmatpush1.xpose.msra.mxu0 0.0
    %1437 = vmatprep.subr.mxu0 0.0
    %1438 = vmatpush1.xpose.msra.mxu0 0.0
    %1439 = vmatprep.subr.mxu0 0.0
    %1440 = vmatpush1.xpose.msra.mxu0 0.0
    %1441 = vmatprep.subr.mxu0 0.0
    %1442 = vmatpush1.xpose.msra.mxu0 0.0
    %1443 = vmatprep.subr.mxu0 0.0
    %1444 = vmatpush1.xpose.msra.mxu0 0.0
    %1445 = vmatprep.subr.mxu0 0.0
    %1446 = vmatpush1.xpose.msra.mxu0 0.0
    %1447 = vmatprep.subr.mxu0 0.0
    %1448 = vmatpush1.xpose.msra.mxu0 0.0
    %1449 = vmatprep.subr.mxu0 0.0
    %1450 = vmatpush1.xpose.msra.mxu0 0.0
    %1451 = vmatprep.subr.mxu0 0.0
    %1452 = vmatpush1.xpose.msra.mxu0 0.0
    %1453 = vmatprep.subr.mxu0 0.0
    %1454 = vmatpush1.xpose.msra.mxu0 0.0
    %1455 = vmatprep.subr.mxu0 0.0
    %1456 = vmatpush1.xpose.msra.mxu0 0.0
    %1457 = vmatprep.subr.mxu0 0.0
    %1458 = vmatpush1.xpose.msra.mxu0 0.0
    %1459 = vmatprep.subr.mxu0 0.0
    %1460 = vmatpush1.xpose.msra.mxu0 0.0
    %1461 = vmatprep.subr.mxu0 0.0
    %1462 = vmatpush1.xpose.msra.mxu0 0.0
    %1463 = vmatprep.subr.mxu0 0.0
    %1464 = vmatpush1.xpose.msra.mxu0 0.0
    %1465 = vmatprep.subr.mxu0 0.0
    %1466 = vmatpush1.xpose.msra.mxu0 0.0
    %1467 = vmatprep.subr.mxu0 0.0
    %1468 = vmatpush1.xpose.msra.mxu0 0.0
    %1469 = vmatprep.subr.mxu0 0.0
    %1470 = vmatpush1.xpose.msra.mxu0 0.0
    %1471 = vmatprep.subr.mxu0 0.0
    %1472 = vmatpush1.xpose.msra.mxu0 0.0
    %1473 = vmatprep.subr.mxu0 0.0
    %1474 = vmatpush1.xpose.msra.mxu0 0.0
    %1475 = vmatprep.subr.mxu0 0.0
    %1476 = vmatpush1.xpose.msra.mxu0 0.0
    %1477 = vmatprep.mubr.f32.mxu0 0.0
    %1478 = vmatmul.mubr.f32.gmra.mrb[0].mxu0 %v1409
    %v1479 = vpop.f32.mrb[0].mxu0
    %v1480 = vadd.f32 0.0, %v1479
    %v1481 = vpop.f32.mrb[0].mxu0
    %1482 = vdwg.mxu0
    %1483 = vrot.lane.b32.xlu0 %v1226, 112
    %v1484 = vpop.permute.xlu0 %1483
    %1485 = vrot.lane.b32.xlu0 %v1226, 80
    %v1486 = vpop.permute.xlu0 %1485
    %v1487 = vsel %vm277, %v1484, 0
    %v1489 = vsel %vm277, %v1486, 0
    %1491 = vmatprep.subr.mxu0 0.0
    %1492 = vmatpush1.xpose.msra.mxu0 %v1489
    %1493 = vmatprep.subr.mxu0 0.0
    %1494 = vmatpush1.xpose.msra.mxu0 0.0
    %1495 = vmatprep.subr.mxu0 0.0
    %1496 = vmatpush1.xpose.msra.mxu0 0.0
    %1497 = vmatprep.subr.mxu0 0.0
    %1498 = vmatpush1.xpose.msra.mxu0 0.0
    %1499 = vmatprep.subr.mxu0 0.0
    %1500 = vmatpush1.xpose.msra.mxu0 0.0
    %1501 = vmatprep.subr.mxu0 0.0
    %1502 = vmatpush1.xpose.msra.mxu0 0.0
    %1503 = vmatprep.subr.mxu0 0.0
    %1504 = vmatpush1.xpose.msra.mxu0 0.0
    %1505 = vmatprep.subr.mxu0 0.0
    %1506 = vmatpush1.xpose.msra.mxu0 0.0
    %1507 = vmatprep.subr.mxu0 0.0
    %1508 = vmatpush1.xpose.msra.mxu0 0.0
    %1509 = vmatprep.subr.mxu0 0.0
    %1510 = vmatpush1.xpose.msra.mxu0 0.0
    %1511 = vmatprep.subr.mxu0 0.0
    %1512 = vmatpush1.xpose.msra.mxu0 0.0
    %1513 = vmatprep.subr.mxu0 0.0
    %1514 = vmatpush1.xpose.msra.mxu0 0.0
    %1515 = vmatprep.subr.mxu0 0.0
    %1516 = vmatpush1.xpose.msra.mxu0 0.0
    %1517 = vmatprep.subr.mxu0 0.0
    %1518 = vmatpush1.xpose.msra.mxu0 0.0
    %1519 = vmatprep.subr.mxu0 0.0
    %1520 = vmatpush1.xpose.msra.mxu0 0.0
    %1521 = vmatprep.subr.mxu0 0.0
    %1522 = vmatpush1.xpose.msra.mxu0 0.0
    %1523 = vmatprep.subr.mxu0 0.0
    %1524 = vmatpush1.xpose.msra.mxu0 0.0
    %1525 = vmatprep.subr.mxu0 0.0
    %1526 = vmatpush1.xpose.msra.mxu0 0.0
    %1527 = vmatprep.subr.mxu0 0.0
    %1528 = vmatpush1.xpose.msra.mxu0 0.0
    %1529 = vmatprep.subr.mxu0 0.0
    %1530 = vmatpush1.xpose.msra.mxu0 0.0
    %1531 = vmatprep.subr.mxu0 0.0
    %1532 = vmatpush1.xpose.msra.mxu0 0.0
    %1533 = vmatprep.subr.mxu0 0.0
    %1534 = vmatpush1.xpose.msra.mxu0 0.0
    %1535 = vmatprep.subr.mxu0 0.0
    %1536 = vmatpush1.xpose.msra.mxu0 0.0
    %1537 = vmatprep.subr.mxu0 0.0
    %1538 = vmatpush1.xpose.msra.mxu0 0.0
    %1539 = vmatprep.subr.mxu0 0.0
    %1540 = vmatpush1.xpose.msra.mxu0 0.0
    %1541 = vmatprep.subr.mxu0 0.0
    %1542 = vmatpush1.xpose.msra.mxu0 0.0
    %1543 = vmatprep.subr.mxu0 0.0
    %1544 = vmatpush1.xpose.msra.mxu0 0.0
    %1545 = vmatprep.subr.mxu0 0.0
    %1546 = vmatpush1.xpose.msra.mxu0 0.0
    %1547 = vmatprep.subr.mxu0 0.0
    %1548 = vmatpush1.xpose.msra.mxu0 0.0
    %1549 = vmatprep.subr.mxu0 0.0
    %1550 = vmatpush1.xpose.msra.mxu0 0.0
    %1551 = vmatprep.subr.mxu0 0.0
    %1552 = vmatpush1.xpose.msra.mxu0 0.0
    %1553 = vmatprep.subr.mxu0 0.0
    %1554 = vmatpush1.xpose.msra.mxu0 0.0
    %1555 = vmatprep.mubr.f32.mxu0 0.0
    %1556 = vmatmul.mubr.f32.gmra.mrb[0].mxu0 %v1487
    %v1557 = vpop.f32.mrb[0].mxu0
    %v1558 = vadd.f32 0.0, %v1557
    %v1559 = vpop.f32.mrb[0].mxu0
    %1560 = vdwg.mxu0
    %v1561 = vsel %vm429, %v1480, -inf
    %1562 = vmax.xlane.f32.xlu0 %v1561
    %v1563 = vpop.xlane.xlu0 %1562
    %v1564 = vsel %vm429, %v1558, -inf
    %1565 = vmax.xlane.f32.xlu0 %v1564
    %v1566 = vpop.xlane.xlu0 %1565
    %v1567 = vsub.f32 %v1480, %v1563
    %v1568 = vsub.f32 %v1558, %v1566
    %v1569 = vmul.f32 %v1567, 1.442695
    %v1570 = vpow.pop %v1569
    %v1571 = vmul.f32 %v1568, 1.442695
    %v1572 = vpow.pop %v1571
    %v1573 = vsel %vm429, %v1570, 0.0
    %1574 = vadd.xlane.f32.xlu0 %v1573
    %v1575 = vpop.xlane.xlu0 %1574
    %v1576 = vsel %vm429, %v1572, 0.0
    %1577 = vadd.xlane.f32.xlu0 %v1576
    %v1578 = vpop.xlane.xlu0 %1577
    %v1579 = vrcp.pop %v1575
    %v1580 = vrcp.pop %v1578
    %v1581 = vmul.f32 %v1570, %v1579
    %v1582 = vmul.f32 %v1572, %v1580
    %1583 = vrot.lane.b32.xlu0 %v1221, 32
    %v1584 = vpop.permute.xlu0 %1583
    %v1587 = vsel %vm429, %v1581, 0
    %1589 = vmatprep.subr.mxu0 0.0
    %1590 = vmatpush1.msra.mxu0 %v1584
    %1591 = vmatprep.subr.mxu0 0.0
    %1592 = vmatpush1.msra.mxu0 0.0
    %1593 = vmatprep.subr.mxu0 0.0
    %1594 = vmatpush1.msra.mxu0 0.0
    %1595 = vmatprep.subr.mxu0 0.0
    %1596 = vmatpush1.msra.mxu0 0.0
    %1597 = vmatprep.subr.mxu0 0.0
    %1598 = vmatpush1.msra.mxu0 0.0
    %1599 = vmatprep.subr.mxu0 0.0
    %1600 = vmatpush1.msra.mxu0 0.0
    %1601 = vmatprep.subr.mxu0 0.0
    %1602 = vmatpush1.msra.mxu0 0.0
    %1603 = vmatprep.subr.mxu0 0.0
    %1604 = vmatpush1.msra.mxu0 0.0
    %1605 = vmatprep.subr.mxu0 0.0
    %1606 = vmatpush1.msra.mxu0 0.0
    %1607 = vmatprep.subr.mxu0 0.0
    %1608 = vmatpush1.msra.mxu0 0.0
    %1609 = vmatprep.subr.mxu0 0.0
    %1610 = vmatpush1.msra.mxu0 0.0
    %1611 = vmatprep.subr.mxu0 0.0
    %1612 = vmatpush1.msra.mxu0 0.0
    %1613 = vmatprep.subr.mxu0 0.0
    %1614 = vmatpush1.msra.mxu0 0.0
    %1615 = vmatprep.subr.mxu0 0.0
    %1616 = vmatpush1.msra.mxu0 0.0
    %1617 = vmatprep.subr.mxu0 0.0
    %1618 = vmatpush1.msra.mxu0 0.0
    %1619 = vmatprep.subr.mxu0 0.0
    %1620 = vmatpush1.msra.mxu0 0.0
    %1621 = vmatprep.subr.mxu0 0.0
    %1622 = vmatpush1.msra.mxu0 0.0
    %1623 = vmatprep.subr.mxu0 0.0
    %1624 = vmatpush1.msra.mxu0 0.0
    %1625 = vmatprep.subr.mxu0 0.0
    %1626 = vmatpush1.msra.mxu0 0.0
    %1627 = vmatprep.subr.mxu0 0.0
    %1628 = vmatpush1.msra.mxu0 0.0
    %1629 = vmatprep.subr.mxu0 0.0
    %1630 = vmatpush1.msra.mxu0 0.0
    %1631 = vmatprep.subr.mxu0 0.0
    %1632 = vmatpush1.msra.mxu0 0.0
    %1633 = vmatprep.subr.mxu0 0.0
    %1634 = vmatpush1.msra.mxu0 0.0
    %1635 = vmatprep.subr.mxu0 0.0
    %1636 = vmatpush1.msra.mxu0 0.0
    %1637 = vmatprep.subr.mxu0 0.0
    %1638 = vmatpush1.msra.mxu0 0.0
    %1639 = vmatprep.subr.mxu0 0.0
    %1640 = vmatpush1.msra.mxu0 0.0
    %1641 = vmatprep.subr.mxu0 0.0
    %1642 = vmatpush1.msra.mxu0 0.0
    %1643 = vmatprep.subr.mxu0 0.0
    %1644 = vmatpush1.msra.mxu0 0.0
    %1645 = vmatprep.subr.mxu0 0.0
    %1646 = vmatpush1.msra.mxu0 0.0
    %1647 = vmatprep.subr.mxu0 0.0
    %1648 = vmatpush1.msra.mxu0 0.0
    %1649 = vmatprep.subr.mxu0 0.0
    %1650 = vmatpush1.msra.mxu0 0.0
    %1651 = vmatprep.subr.mxu0 0.0
    %1652 = vmatpush1.msra.mxu0 0.0
    %1653 = vmatprep.mubr.f32.mxu0 0.0
    %1654 = vmatmul.mubr.f32.gmra.mrb[0].mxu0 %v1587
    %v1655 = vpop.f32.mrb[0].mxu0
    %v1656 = vadd.f32 0.0, %v1655
    %v1657 = vpop.f32.mrb[0].mxu0
    %1658 = vdwg.mxu0
    %1659 = vrot.lane.b32.xlu0 %v1226, 32
    %v1660 = vpop.permute.xlu0 %1659
    %v1663 = vsel %vm429, %v1582, 0
    %1665 = vmatprep.subr.mxu0 0.0
    %1666 = vmatpush1.msra.mxu0 %v1660
    %1667 = vmatprep.subr.mxu0 0.0
    %1668 = vmatpush1.msra.mxu0 0.0
    %1669 = vmatprep.subr.mxu0 0.0
    %1670 = vmatpush1.msra.mxu0 0.0
    %1671 = vmatprep.subr.mxu0 0.0
    %1672 = vmatpush1.msra.mxu0 0.0
    %1673 = vmatprep.subr.mxu0 0.0
    %1674 = vmatpush1.msra.mxu0 0.0
    %1675 = vmatprep.subr.mxu0 0.0
    %1676 = vmatpush1.msra.mxu0 0.0
    %1677 = vmatprep.subr.mxu0 0.0
    %1678 = vmatpush1.msra.mxu0 0.0
    %1679 = vmatprep.subr.mxu0 0.0
    %1680 = vmatpush1.msra.mxu0 0.0
    %1681 = vmatprep.subr.mxu0 0.0
    %1682 = vmatpush1.msra.mxu0 0.0
    %1683 = vmatprep.subr.mxu0 0.0
    %1684 = vmatpush1.msra.mxu0 0.0
    %1685 = vmatprep.subr.mxu0 0.0
    %1686 = vmatpush1.msra.mxu0 0.0
    %1687 = vmatprep.subr.mxu0 0.0
    %1688 = vmatpush1.msra.mxu0 0.0
    %1689 = vmatprep.subr.mxu0 0.0
    %1690 = vmatpush1.msra.mxu0 0.0
    %1691 = vmatprep.subr.mxu0 0.0
    %1692 = vmatpush1.msra.mxu0 0.0
    %1693 = vmatprep.subr.mxu0 0.0
    %1694 = vmatpush1.msra.mxu0 0.0
    %1695 = vmatprep.subr.mxu0 0.0
    %1696 = vmatpush1.msra.mxu0 0.0
    %1697 = vmatprep.subr.mxu0 0.0
    %1698 = vmatpush1.msra.mxu0 0.0
    %1699 = vmatprep.subr.mxu0 0.0
    %1700 = vmatpush1.msra.mxu0 0.0
    %1701 = vmatprep.subr.mxu0 0.0
    %1702 = vmatpush1.msra.mxu0 0.0
    %1703 = vmatprep.subr.mxu0 0.0
    %1704 = vmatpush1.msra.mxu0 0.0
    %1705 = vmatprep.subr.mxu0 0.0
    %1706 = vmatpush1.msra.mxu0 0.0
    %1707 = vmatprep.subr.mxu0 0.0
    %1708 = vmatpush1.msra.mxu0 0.0
    %1709 = vmatprep.subr.mxu0 0.0
    %1710 = vmatpush1.msra.mxu0 0.0
    %1711 = vmatprep.subr.mxu0 0.0
    %1712 = vmatpush1.msra.mxu0 0.0
    %1713 = vmatprep.subr.mxu0 0.0
    %1714 = vmatpush1.msra.mxu0 0.0
    %1715 = vmatprep.subr.mxu0 0.0
    %1716 = vmatpush1.msra.mxu0 0.0
    %1717 = vmatprep.subr.mxu0 0.0
    %1718 = vmatpush1.msra.mxu0 0.0
    %1719 = vmatprep.subr.mxu0 0.0
    %1720 = vmatpush1.msra.mxu0 0.0
    %1721 = vmatprep.subr.mxu0 0.0
    %1722 = vmatpush1.msra.mxu0 0.0
    %1723 = vmatprep.subr.mxu0 0.0
    %1724 = vmatpush1.msra.mxu0 0.0
    %1725 = vmatprep.subr.mxu0 0.0
    %1726 = vmatpush1.msra.mxu0 0.0
    %1727 = vmatprep.subr.mxu0 0.0
    %1728 = vmatpush1.msra.mxu0 0.0
    %1729 = vmatprep.mubr.f32.mxu0 0.0
    %1730 = vmatmul.mubr.f32.gmra.mrb[0].mxu0 %v1663
    %v1731 = vpop.f32.mrb[0].mxu0
    %v1732 = vadd.f32 0.0, %v1731
    %v1733 = vpop.f32.mrb[0].mxu0
    %1734 = vdwg.mxu0
    %1735 = vrot.lane.b32.xlu0 %v1221, 64
    %v1736 = vpop.permute.xlu0 %1735
    %v1739 = vsel %vm429, %v1403, 0
    %1741 = vmatprep.subr.mxu0 0.0
    %1742 = vmatpush1.msra.mxu0 %v1736
    %1743 = vmatprep.subr.mxu0 0.0
    %1744 = vmatpush1.msra.mxu0 0.0
    %1745 = vmatprep.subr.mxu0 0.0
    %1746 = vmatpush1.msra.mxu0 0.0
    %1747 = vmatprep.subr.mxu0 0.0
    %1748 = vmatpush1.msra.mxu0 0.0
    %1749 = vmatprep.subr.mxu0 0.0
    %1750 = vmatpush1.msra.mxu0 0.0
    %1751 = vmatprep.subr.mxu0 0.0
    %1752 = vmatpush1.msra.mxu0 0.0
    %1753 = vmatprep.subr.mxu0 0.0
    %1754 = vmatpush1.msra.mxu0 0.0
    %1755 = vmatprep.subr.mxu0 0.0
    %1756 = vmatpush1.msra.mxu0 0.0
    %1757 = vmatprep.subr.mxu0 0.0
    %1758 = vmatpush1.msra.mxu0 0.0
    %1759 = vmatprep.subr.mxu0 0.0
    %1760 = vmatpush1.msra.mxu0 0.0
    %1761 = vmatprep.subr.mxu0 0.0
    %1762 = vmatpush1.msra.mxu0 0.0
    %1763 = vmatprep.subr.mxu0 0.0
    %1764 = vmatpush1.msra.mxu0 0.0
    %1765 = vmatprep.subr.mxu0 0.0
    %1766 = vmatpush1.msra.mxu0 0.0
    %1767 = vmatprep.subr.mxu0 0.0
    %1768 = vmatpush1.msra.mxu0 0.0
    %1769 = vmatprep.subr.mxu0 0.0
    %1770 = vmatpush1.msra.mxu0 0.0
    %1771 = vmatprep.subr.mxu0 0.0
    %1772 = vmatpush1.msra.mxu0 0.0
    %1773 = vmatprep.subr.mxu0 0.0
    %1774 = vmatpush1.msra.mxu0 0.0
    %1775 = vmatprep.subr.mxu0 0.0
    %1776 = vmatpush1.msra.mxu0 0.0
    %1777 = vmatprep.subr.mxu0 0.0
    %1778 = vmatpush1.msra.mxu0 0.0
    %1779 = vmatprep.subr.mxu0 0.0
    %1780 = vmatpush1.msra.mxu0 0.0
    %1781 = vmatprep.subr.mxu0 0.0
    %1782 = vmatpush1.msra.mxu0 0.0
    %1783 = vmatprep.subr.mxu0 0.0
    %1784 = vmatpush1.msra.mxu0 0.0
    %1785 = vmatprep.subr.mxu0 0.0
    %1786 = vmatpush1.msra.mxu0 0.0
    %1787 = vmatprep.subr.mxu0 0.0
    %1788 = vmatpush1.msra.mxu0 0.0
    %1789 = vmatprep.subr.mxu0 0.0
    %1790 = vmatpush1.msra.mxu0 0.0
    %1791 = vmatprep.subr.mxu0 0.0
    %1792 = vmatpush1.msra.mxu0 0.0
    %1793 = vmatprep.subr.mxu0 0.0
    %1794 = vmatpush1.msra.mxu0 0.0
    %1795 = vmatprep.subr.mxu0 0.0
    %1796 = vmatpush1.msra.mxu0 0.0
    %1797 = vmatprep.subr.mxu0 0.0
    %1798 = vmatpush1.msra.mxu0 0.0
    %1799 = vmatprep.subr.mxu0 0.0
    %1800 = vmatpush1.msra.mxu0 0.0
    %1801 = vmatprep.subr.mxu0 0.0
    %1802 = vmatpush1.msra.mxu0 0.0
    %1803 = vmatprep.subr.mxu0 0.0
    %1804 = vmatpush1.msra.mxu0 0.0
    %1805 = vmatprep.mubr.f32.mxu0 0.0
    %1806 = vmatmul.mubr.f32.gmra.mrb[0].mxu0 %v1739
    %v1807 = vpop.f32.mrb[0].mxu0
    %v1808 = vadd.f32 %v1656, %v1807
    %v1809 = vpop.f32.mrb[0].mxu0
    %1810 = vdwg.mxu0
    %1811 = vrot.lane.b32.xlu0 %v1226, 64
    %v1812 = vpop.permute.xlu0 %1811
    %v1815 = vsel %vm429, %v1404, 0
    %1817 = vmatprep.subr.mxu0 0.0
    %1818 = vmatpush1.msra.mxu0 %v1812
    %1819 = vmatprep.subr.mxu0 0.0
    %1820 = vmatpush1.msra.mxu0 0.0
    %1821 = vmatprep.subr.mxu0 0.0
    %1822 = vmatpush1.msra.mxu0 0.0
    %1823 = vmatprep.subr.mxu0 0.0
    %1824 = vmatpush1.msra.mxu0 0.0
    %1825 = vmatprep.subr.mxu0 0.0
    %1826 = vmatpush1.msra.mxu0 0.0
    %1827 = vmatprep.subr.mxu0 0.0
    %1828 = vmatpush1.msra.mxu0 0.0
    %1829 = vmatprep.subr.mxu0 0.0
    %1830 = vmatpush1.msra.mxu0 0.0
    %1831 = vmatprep.subr.mxu0 0.0
    %1832 = vmatpush1.msra.mxu0 0.0
    %1833 = vmatprep.subr.mxu0 0.0
    %1834 = vmatpush1.msra.mxu0 0.0
    %1835 = vmatprep.subr.mxu0 0.0
    %1836 = vmatpush1.msra.mxu0 0.0
    %1837 = vmatprep.subr.mxu0 0.0
    %1838 = vmatpush1.msra.mxu0 0.0
    %1839 = vmatprep.subr.mxu0 0.0
    %1840 = vmatpush1.msra.mxu0 0.0
    %1841 = vmatprep.subr.mxu0 0.0
    %1842 = vmatpush1.msra.mxu0 0.0
    %1843 = vmatprep.subr.mxu0 0.0
    %1844 = vmatpush1.msra.mxu0 0.0
    %1845 = vmatprep.subr.mxu0 0.0
    %1846 = vmatpush1.msra.mxu0 0.0
    %1847 = vmatprep.subr.mxu0 0.0
    %1848 = vmatpush1.msra.mxu0 0.0
    %1849 = vmatprep.subr.mxu0 0.0
    %1850 = vmatpush1.msra.mxu0 0.0
    %1851 = vmatprep.subr.mxu0 0.0
    %1852 = vmatpush1.msra.mxu0 0.0
    %1853 = vmatprep.subr.mxu0 0.0
    %1854 = vmatpush1.msra.mxu0 0.0
    %1855 = vmatprep.subr.mxu0 0.0
    %1856 = vmatpush1.msra.mxu0 0.0
    %1857 = vmatprep.subr.mxu0 0.0
    %1858 = vmatpush1.msra.mxu0 0.0
    %1859 = vmatprep.subr.mxu0 0.0
    %1860 = vmatpush1.msra.mxu0 0.0
    %1861 = vmatprep.subr.mxu0 0.0
    %1862 = vmatpush1.msra.mxu0 0.0
    %1863 = vmatprep.subr.mxu0 0.0
    %1864 = vmatpush1.msra.mxu0 0.0
    %1865 = vmatprep.subr.mxu0 0.0
    %1866 = vmatpush1.msra.mxu0 0.0
    %1867 = vmatprep.subr.mxu0 0.0
    %1868 = vmatpush1.msra.mxu0 0.0
    %1869 = vmatprep.subr.mxu0 0.0
    %1870 = vmatpush1.msra.mxu0 0.0
    %1871 = vmatprep.subr.mxu0 0.0
    %1872 = vmatpush1.msra.mxu0 0.0
    %1873 = vmatprep.subr.mxu0 0.0
    %1874 = vmatpush1.msra.mxu0 0.0
    %1875 = vmatprep.subr.mxu0 0.0
    %1876 = vmatpush1.msra.mxu0 0.0
    %1877 = vmatprep.subr.mxu0 0.0
    %1878 = vmatpush1.msra.mxu0 0.0
    %1879 = vmatprep.subr.mxu0 0.0
    %1880 = vmatpush1.msra.mxu0 0.0
    %1881 = vmatprep.mubr.f32.mxu0 0.0
    %1882 = vmatmul.mubr.f32.gmra.mrb[0].mxu0 %v1815
    %v1883 = vpop.f32.mrb[0].mxu0
    %v1884 = vadd.f32 %v1732, %v1883
    %v1885 = vpop.f32.mrb[0].mxu0
    %1886 = vdwg.mxu0
    %v1887 = vadd.f32 %v1121, %v1808
    %v1888 = vadd.f32 %v1122, %v1884
    %v1890 = vlaneseq
    %v1891 = vshrl.u32 %v1890, 7
    %v1892 = vsub.s32 0, %v1891
    %v1893 = vrot.slane %v1129, %v1892
    %v1895 = vadd.f32 %v1887, %v1893
    %v1896 = vadd.f32 %v1888, %v1893
    %v1898 = vlaneseq
    %v1899 = vshrl.u32 %v1898, 7
    %v1900 = vsub.s32 0, %v1899
    %v1901 = vrot.slane %v1136, %v1900
    %v1904 = vsel %vm63, %v1895, 0
    %v1907 = vsel %vm63, %v1896, 0
    %1909 = vmatprep.subr.mxu0 0.0
    %1910 = vmatpush1.msra.mxu0 %v1131
    %1911 = vmatprep.subr.mxu0 0.0
    %1912 = vmatpush1.msra.mxu0 %v1132
    %1913 = vmatprep.subr.mxu0 0.0
    %1914 = vmatpush1.msra.mxu0 %v1133
    %1915 = vmatprep.subr.mxu0 0.0
    %1916 = vmatpush1.msra.mxu0 %v1134
    %1917 = vmatprep.subr.mxu0 0.0
    %1918 = vmatpush1.msra.mxu0 0.0
    %1919 = vmatprep.subr.mxu0 0.0
    %1920 = vmatpush1.msra.mxu0 0.0
    %1921 = vmatprep.subr.mxu0 0.0
    %1922 = vmatpush1.msra.mxu0 0.0
    %1923 = vmatprep.subr.mxu0 0.0
    %1924 = vmatpush1.msra.mxu0 0.0
    %1925 = vmatprep.subr.mxu0 0.0
    %1926 = vmatpush1.msra.mxu0 0.0
    %1927 = vmatprep.subr.mxu0 0.0
    %1928 = vmatpush1.msra.mxu0 0.0
    %1929 = vmatprep.subr.mxu0 0.0
    %1930 = vmatpush1.msra.mxu0 0.0
    %1931 = vmatprep.subr.mxu0 0.0
    %1932 = vmatpush1.msra.mxu0 0.0
    %1933 = vmatprep.subr.mxu0 0.0
    %1934 = vmatpush1.msra.mxu0 0.0
    %1935 = vmatprep.subr.mxu0 0.0
    %1936 = vmatpush1.msra.mxu0 0.0
    %1937 = vmatprep.subr.mxu0 0.0
    %1938 = vmatpush1.msra.mxu0 0.0
    %1939 = vmatprep.subr.mxu0 0.0
    %1940 = vmatpush1.msra.mxu0 0.0
    %1941 = vmatprep.subr.mxu0 0.0
    %1942 = vmatpush1.msra.mxu0 0.0
    %1943 = vmatprep.subr.mxu0 0.0
    %1944 = vmatpush1.msra.mxu0 0.0
    %1945 = vmatprep.subr.mxu0 0.0
    %1946 = vmatpush1.msra.mxu0 0.0
    %1947 = vmatprep.subr.mxu0 0.0
    %1948 = vmatpush1.msra.mxu0 0.0
    %1949 = vmatprep.subr.mxu0 0.0
    %1950 = vmatpush1.msra.mxu0 0.0
    %1951 = vmatprep.subr.mxu0 0.0
    %1952 = vmatpush1.msra.mxu0 0.0
    %1953 = vmatprep.subr.mxu0 0.0
    %1954 = vmatpush1.msra.mxu0 0.0
    %1955 = vmatprep.subr.mxu0 0.0
    %1956 = vmatpush1.msra.mxu0 0.0
    %1957 = vmatprep.subr.mxu0 0.0
    %1958 = vmatpush1.msra.mxu0 0.0
    %1959 = vmatprep.subr.mxu0 0.0
    %1960 = vmatpush1.msra.mxu0 0.0
    %1961 = vmatprep.subr.mxu0 0.0
    %1962 = vmatpush1.msra.mxu0 0.0
    %1963 = vmatprep.subr.mxu0 0.0
    %1964 = vmatpush1.msra.mxu0 0.0
    %1965 = vmatprep.subr.mxu0 0.0
    %1966 = vmatpush1.msra.mxu0 0.0
    %1967 = vmatprep.subr.mxu0 0.0
    %1968 = vmatpush1.msra.mxu0 0.0
    %1969 = vmatprep.subr.mxu0 0.0
    %1970 = vmatpush1.msra.mxu0 0.0
    %1971 = vmatprep.subr.mxu0 0.0
    %1972 = vmatpush1.msra.mxu0 0.0
    %1973 = vmatprep.mubr.f32.mxu0 0.0
    %1974 = vmatmul.mubr.f32.gmra.mrb[0].mxu0 %v1904
    %v1975 = vpop.f32.mrb[0].mxu0
    %v1976 = vadd.f32 %v1901, %v1975
    %v1977 = vpop.f32.mrb[0].mxu0
    %1978 = vmatprep.mubr.f32.mxu0 0.0
    %1979 = vmatmul.mubr.f32.gmra.mrb[0].mxu0 %v1907
    %v1980 = vpop.f32.mrb[0].mxu0
    %v1981 = vadd.f32 %v1901, %v1980
    %v1982 = vpop.f32.mrb[0].mxu0
    %1983 = vdwg.mxu0
    %v1984 = vmax.f32 %v1976, 0.0
    %v1985 = vmax.f32 %v1981, 0.0
    %v1987 = vlaneseq
    %v1988 = vshrl.u32 %v1987, 7
    %v1989 = vsub.s32 0, %v1988
    %v1990 = vrot.slane %v1147, %v1989
    %v1993 = vsel %vm1039, %v1984, 0
    %v1996 = vsel %vm1039, %v1985, 0
    %1998 = vmatprep.subr.mxu0 0.0
    %1999 = vmatpush1.msra.mxu0 %v1138
    %2000 = vmatprep.subr.mxu0 0.0
    %2001 = vmatpush1.msra.mxu0 %v1139
    %2002 = vmatprep.subr.mxu0 0.0
    %2003 = vmatpush1.msra.mxu0 %v1140
    %2004 = vmatprep.subr.mxu0 0.0
    %2005 = vmatpush1.msra.mxu0 %v1141
    %2006 = vmatprep.subr.mxu0 0.0
    %2007 = vmatpush1.msra.mxu0 %v1142
    %2008 = vmatprep.subr.mxu0 0.0
    %2009 = vmatpush1.msra.mxu0 %v1143
    %2010 = vmatprep.subr.mxu0 0.0
    %2011 = vmatpush1.msra.mxu0 %v1144
    %2012 = vmatprep.subr.mxu0 0.0
    %2013 = vmatpush1.msra.mxu0 %v1145
    %2014 = vmatprep.subr.mxu0 0.0
    %2015 = vmatpush1.msra.mxu0 0.0
    %2016 = vmatprep.subr.mxu0 0.0
    %2017 = vmatpush1.msra.mxu0 0.0
    %2018 = vmatprep.subr.mxu0 0.0
    %2019 = vmatpush1.msra.mxu0 0.0
    %2020 = vmatprep.subr.mxu0 0.0
    %2021 = vmatpush1.msra.mxu0 0.0
    %2022 = vmatprep.subr.mxu0 0.0
    %2023 = vmatpush1.msra.mxu0 0.0
    %2024 = vmatprep.subr.mxu0 0.0
    %2025 = vmatpush1.msra.mxu0 0.0
    %2026 = vmatprep.subr.mxu0 0.0
    %2027 = vmatpush1.msra.mxu0 0.0
    %2028 = vmatprep.subr.mxu0 0.0
    %2029 = vmatpush1.msra.mxu0 0.0
    %2030 = vmatprep.subr.mxu0 0.0
    %2031 = vmatpush1.msra.mxu0 0.0
    %2032 = vmatprep.subr.mxu0 0.0
    %2033 = vmatpush1.msra.mxu0 0.0
    %2034 = vmatprep.subr.mxu0 0.0
    %2035 = vmatpush1.msra.mxu0 0.0
    %2036 = vmatprep.subr.mxu0 0.0
    %2037 = vmatpush1.msra.mxu0 0.0
    %2038 = vmatprep.subr.mxu0 0.0
    %2039 = vmatpush1.msra.mxu0 0.0
    %2040 = vmatprep.subr.mxu0 0.0
    %2041 = vmatpush1.msra.mxu0 0.0
    %2042 = vmatprep.subr.mxu0 0.0
    %2043 = vmatpush1.msra.mxu0 0.0
    %2044 = vmatprep.subr.mxu0 0.0
    %2045 = vmatpush1.msra.mxu0 0.0
    %2046 = vmatprep.subr.mxu0 0.0
    %2047 = vmatpush1.msra.mxu0 0.0
    %2048 = vmatprep.subr.mxu0 0.0
    %2049 = vmatpush1.msra.mxu0 0.0
    %2050 = vmatprep.subr.mxu0 0.0
    %2051 = vmatpush1.msra.mxu0 0.0
    %2052 = vmatprep.subr.mxu0 0.0
    %2053 = vmatpush1.msra.mxu0 0.0
    %2054 = vmatprep.subr.mxu0 0.0
    %2055 = vmatpush1.msra.mxu0 0.0
    %2056 = vmatprep.subr.mxu0 0.0
    %2057 = vmatpush1.msra.mxu0 0.0
    %2058 = vmatprep.subr.mxu0 0.0
    %2059 = vmatpush1.msra.mxu0 0.0
    %2060 = vmatprep.subr.mxu0 0.0
    %2061 = vmatpush1.msra.mxu0 0.0
    %2062 = vmatprep.mubr.f32.mxu0 0.0
    %2063 = vmatmul.mubr.f32.gmra.mrb[0].mxu0 %v1993
    %v2064 = vpop.f32.mrb[0].mxu0
    %v2065 = vadd.f32 %v1990, %v2064
    %v2066 = vpop.f32.mrb[0].mxu0
    %2067 = vmatprep.mubr.f32.mxu0 0.0
    %2068 = vmatmul.mubr.f32.gmra.mrb[0].mxu0 %v1996
    %v2069 = vpop.f32.mrb[0].mxu0
    %v2070 = vadd.f32 %v1990, %v2069
    %v2071 = vpop.f32.mrb[0].mxu0
    %2072 = vdwg.mxu0
    %v2073 = vadd.f32 %v1895, %v2065
    %v2074 = vadd.f32 %v1896, %v2070
    %v2075 = vld [vmem:[%s10] sm:$0x1]
    %v2077 = vlaneseq
    %v2078 = vshrl.u32 %v2077, 7
    %v2079 = vsub.s32 0, %v2078
    %v2080 = vrot.slane %v2075, %v2079
    %v2082 = vmul.f32 %v2073, %v2080
    %v2083 = vmul.f32 %v2074, %v2080
    %v2084 = vsel %vm63, %v2082, 0.0
    %2085 = vadd.xlane.f32.xlu0 %v2084
    %v2086 = vpop.xlane.xlu0 %2085
    %v2087 = vsel %vm63, %v2083, 0.0
    %2088 = vadd.xlane.f32.xlu0 %v2087
    %v2089 = vpop.xlane.xlu0 %2088
    %v2090 = vld [vmem:[#allocation2] sm:$0x1]
    %v2092 = vlaneseq
    %v2093 = vshrl.u32 %v2092, 7
    %v2094 = vsub.s32 0, %v2093
    %v2095 = vrot.slane %v2090, %v2094
    %2096 = vset.pattern.permute.xlu0 0
    %2097 = vperm.xlu0 %2096, %v2095
    %v2098 = vpop.permute.xlu0 %2097
    %v2100 = vadd.f32 %v2086, %v2098
    %v2101 = vadd.f32 %v2089, %v2098
    %v2102 = vlaneseq
    %v2103 = vand.u32 %v2102, 127
    %vm2104 = vcmp.eq.s32.totalorder %v2103, 7
    %v2107 = vlaneseq
    %v2108 = vshrl.u32 %v2107, 7
    %v2109 = vsub.s32 %v2103, %v2108
    %v2110 = vrot.slane %v2100, %v2109
    %v2111 = vlaneseq
    %v2112 = vshrl.u32 %v2111, 7
    %v2113 = vsub.s32 %v2103, %v2112
    %v2114 = vrot.slane %v2101, %v2113
    %v2115 = vsel %vm61, %v2114, %v2110
    %v2117 = vsel %vm2104, -inf, %v2115
    %vm2118 = vcmask 58368
    %v2119 = vsel %vm2118, %v2117, -inf
    %2120 = vmax.xlane.f32.xlu0 %v2119
    %v2121 = vpop.xlane.xlu0 %2120
    %v2122 = vsub.f32 %v2117, %v2121
    %v2123 = vmul.f32 %v2122, 1.442695
    %v2124 = vpow.pop %v2123
    %v2125 = vsel %vm2118, %v2124, 0.0
    %2126 = vadd.xlane.f32.xlu0 %v2125
    %v2127 = vpop.xlane.xlu0 %2126
    %v2128 = vrcp.pop %v2127
    %v2129 = vmul.f32 %v2124, %v2128
    %vm2130 = vcmp.le.f32.partialorder %v2129, 1e-05
    %v2131 = vadd.f32 %v2129, 1e-07
    %v2132 = vsel %vm2130, %v2131, %v2129
    %v2133 = vld [vmem:[%s1] sm:$0x3]
    %2134 = vset.pattern.permute.xlu0 0
    %2135 = vperm.xlu0 %2134, %v2133
    %v2136 = vpop.permute.xlu0 %2135
    %vm2137 = vcmp.eq.s32.totalorder %v2103, %v2136
    %2139 = vset.pattern.permute.xlu0 0
    %2140 = vperm.xlu0 %2139, %v2132
    %v2141 = vpop.permute.xlu0 %2140
    %v2143 = vsel %vm2137, %v2141, 1e-20
    %2144 = vset.pattern.permute.xlu0 1
    %2145 = vperm.xlu0 %2144, %v2133
    %v2146 = vpop.permute.xlu0 %2145
    %vm2147 = vcmp.eq.s32.totalorder %v2103, %v2146
    %2148 = vset.pattern.permute.xlu0 1
    %2149 = vperm.xlu0 %2148, %v2132
    %v2150 = vpop.permute.xlu0 %2149
    %v2152 = vsel %vm2147, %v2150, %v2143
    %2153 = vset.pattern.permute.xlu0 2
    %2154 = vperm.xlu0 %2153, %v2133
    %v2155 = vpop.permute.xlu0 %2154
    %vm2156 = vcmp.eq.s32.totalorder %v2103, %v2155
    %2157 = vset.pattern.permute.xlu0 2
    %2158 = vperm.xlu0 %2157, %v2132
    %v2159 = vpop.permute.xlu0 %2158
    %v2161 = vsel %vm2156, %v2159, %v2152
    %2162 = vset.pattern.permute.xlu0 3
    %2163 = vperm.xlu0 %2162, %v2133
    %v2164 = vpop.permute.xlu0 %2163
    %vm2165 = vcmp.eq.s32.totalorder %v2103, %v2164
    %2166 = vset.pattern.permute.xlu0 3
    %2167 = vperm.xlu0 %2166, %v2132
    %v2168 = vpop.permute.xlu0 %2167
    %v2170 = vsel %vm2165, %v2168, %v2161
    %2171 = vset.pattern.permute.xlu0 4
    %2172 = vperm.xlu0 %2171, %v2133
    %v2173 = vpop.permute.xlu0 %2172
    %vm2174 = vcmp.eq.s32.totalorder %v2103, %v2173
    %2175 = vset.pattern.permute.xlu0 4
    %2176 = vperm.xlu0 %2175, %v2132
    %v2177 = vpop.permute.xlu0 %2176
    %v2179 = vsel %vm2174, %v2177, %v2170
    %2180 = vset.pattern.permute.xlu0 5
    %2181 = vperm.xlu0 %2180, %v2133
    %v2182 = vpop.permute.xlu0 %2181
    %vm2183 = vcmp.eq.s32.totalorder %v2103, %v2182
    %2184 = vset.pattern.permute.xlu0 5
    %2185 = vperm.xlu0 %2184, %v2132
    %v2186 = vpop.permute.xlu0 %2185
    %v2188 = vsel %vm2183, %v2186, %v2179
    %2189 = vset.pattern.permute.xlu0 6
    %2190 = vperm.xlu0 %2189, %v2133
    %v2191 = vpop.permute.xlu0 %2190
    %vm2192 = vcmp.eq.s32.totalorder %v2103, %v2191
    %2193 = vset.pattern.permute.xlu0 6
    %2194 = vperm.xlu0 %2193, %v2132
    %v2195 = vpop.permute.xlu0 %2194
    %v2197 = vsel %vm2192, %v2195, %v2188
    %vm2198 = vcmask 123904
    %2199 = vst.msk [vmem:[#allocation3] sm:$0x3] %vm2198, %v2197
    // Predicated region
    $region50: #{tsp_decoder_forward.1} parent=1 // pred_check
      _
    $region51: #{tsp_decoder_forward.1} parent=1 // pred_check_branch
      %2201 = sbr.rel (0) target = $region53
    $region52: #{tsp_decoder_forward.1} parent=1 // pred_region
      %s2203 = ssub.s32 32, 32
      %2204 = vsyncadd [#allocation4], %s2203
      %s2206 = sshll.u32 [#allocation3], 4
      %s2207 = int_to_ptr.vmem [resolvable:$true] %s2206
      %2209 = dma.vmem_to_hbm [thread:$0]  %s2207, 32, %s12, [#allocation4]
    $region53: #{tsp_decoder_forward.1} parent=1 // pred_fallthru
      _
    // Predicated region
    $region54: #{tsp_decoder_forward.1} parent=1 // pred_check
      _
    $region55: #{tsp_decoder_forward.1} parent=1 // pred_check_branch
      %2211 = sbr.rel (0) target = $region57
    $region56: #{tsp_decoder_forward.1} parent=1 // pred_region
      %2212 = dma.done [#allocation4], 32
    $region57: #{tsp_decoder_forward.1} parent=1 // pred_fallthru
      _
    %2213 = vsyncpa [#allocation4], 1

</llo_original>
